<compile_context>
chip_gen: v7x
topology: tpu7x:2x2x1
jax: 0.10.0
libtpu: 0.0.40
codegen_flags: <defaults>
</compile_context>

<pallas_src>
import functools

import jax
import jax.numpy as jnp
from jax.experimental import pallas as pl
from jax.experimental.pallas import tpu as pltpu


# ----------------------------------------------------------------------------
# Kernel: `bb` batch elements of self attention, channels-first (C, N) layout.
# ----------------------------------------------------------------------------
def _self_attention_kernel(x_ref, w_ref, b_ref, o_ref, *, C, P):
    bb = x_ref.shape[0]
    w = w_ref[...]                        # (M, C) bf16, rows = [Wh*gamma; Wf_pad; Wg_pad]
    b = b_ref[...]                        # (M, 1) f32

    for bi in range(bb):                  # static unroll; bb is tiny (1 or 2 here)
        x = x_ref[bi]                     # (C, N) f32, N on lanes

        # Fused h/f/g 1x1-conv projections: one bf16 MXU matmul, f32 accumulate.
        fgh = jnp.dot(w, x.astype(jnp.bfloat16),
                      preferred_element_type=jnp.float32) + b       # (M, N) f32
        h = fgh[:C]                       # (C, N)  (gamma already folded in)
        f = fgh[C:C + P]                  # (P, N)  rows >= C//8 are exactly zero
        g = fgh[C + P:C + 2 * P]          # (P, N)

        # s[i, j] = sum_k f[k, i] * g[k, j]          (torch: bmm(f^T, g))
        # Padded zero rows contribute nothing to the contraction.
        s = jax.lax.dot_general(
            f.astype(jnp.bfloat16), g.astype(jnp.bfloat16),
            (((0,), (0,)), ((), ())),
            preferred_element_type=jnp.float32)                     # (N, N)

        # torch F.softmax(s, dim=1): normalize over axis 0 of s. The
        # normalization is deferred past the output matmul (per-column scale),
        # so we never materialize beta.
        e = jnp.exp(s - jnp.max(s, axis=0, keepdims=True))          # (N, N) f32
        col_sum = jnp.sum(e, axis=0, keepdims=True)                 # (1, N) f32

        # o_un[c, j] = sum_i h[c, i] * e[i, j]       (torch: bmm(h, beta)*col_sum)
        o_un = jnp.dot(h.astype(jnp.bfloat16), e.astype(jnp.bfloat16),
                       preferred_element_type=jnp.float32)          # (C, N)
        o = o_un * pl.reciprocal(col_sum, approx=True)

        # y = gamma * o + x   (gamma already folded into the h projection)
        o_ref[bi] = (o + x).astype(o_ref.dtype)


# ----------------------------------------------------------------------------
# Wrapper
# ----------------------------------------------------------------------------
def _pick_batch_block(B):
    """Batch elements per grid step (generation-aware)."""
    kind = ""
    try:
        kind = jax.devices()[0].device_kind.lower()
    except Exception:
        pass
    # v7x has 2 TensorCores per chip: keep >= 2 parallel grid steps.
    if "v7" in kind and B >= 2 and B % 2 == 0:
        return B // 2
    # Single-TC generations (v5e/v6e): collapse the batch grid to amortize the
    # ~0.35us per-grid-step overhead.
    return B


def self_attention(x_nchw, wf, bf, wg, bg, wh, bh, gamma):
    """x_nchw: (B, C, H, W). 1x1-conv weights as (out, in) matrices."""
    B, C, H, W = x_nchw.shape
    N = H * W
    C8 = wf.shape[0]
    P = ((C8 + 7) // 8) * 8            # pad f/g rows to a sublane multiple
    M = C + 2 * P

    gamma = jnp.asarray(gamma, jnp.float32)
    x_flat = x_nchw.reshape(B, C, N).astype(jnp.float32)

    # Fold gamma into the h projection; concatenate rows as [Wh; Wf_pad; Wg_pad]
    # so every kernel-side slice is sublane-tile aligned (C is a multiple of 8).
    pad = ((0, P - C8), (0, 0))
    w_cat = jnp.concatenate(
        [gamma * wh, jnp.pad(wf, pad), jnp.pad(wg, pad)], axis=0)    # (M, C)
    w_cat = w_cat.astype(jnp.bfloat16)                               # MXU operand
    b_cat = jnp.concatenate(
        [gamma * bh, jnp.pad(bf, (0, P - C8)), jnp.pad(bg, (0, P - C8))],
        axis=0).reshape(M, 1).astype(jnp.float32)

    bb = _pick_batch_block(B)
    if B % bb != 0:
        bb = 1
    steps = B // bb

    # Explicit scoped-VMEM budget (per the review): generous headroom over the
    # actual working set, capped well under every generation's physical VMEM.
    est = (2 * 2 * bb * C * N * 4        # x / out blocks, double-buffered
           + M * C * 2 + M * 4           # weights + bias
           + 4 * N * N * 4 + M * N * 4)  # s, e (+bf16 copies), fgh
    vmem_limit = int(min(64 * 1024 * 1024, max(32 * 1024 * 1024, 2 * est)))

    kernel = functools.partial(_self_attention_kernel, C=C, P=P)

    out = pl.pallas_call(
        kernel,
        out_shape=jax.ShapeDtypeStruct((B, C, N), jnp.float32),
        grid=(steps,),
        in_specs=[
            pl.BlockSpec((bb, C, N), lambda b: (b, 0, 0)),
            pl.BlockSpec((M, C), lambda b: (0, 0)),
            pl.BlockSpec((M, 1), lambda b: (0, 0)),
        ],
        out_specs=pl.BlockSpec((bb, C, N), lambda b: (b, 0, 0)),
        compiler_params=pltpu.CompilerParams(
            dimension_semantics=("parallel",),
            vmem_limit_bytes=vmem_limit),
    )(x_flat, w_cat, b_cat)
    return out.reshape(B, C, H, W)


# ----------------------------------------------------------------------------
# Pure-JAX reference (mirrors the PyTorch forward exactly)
# ----------------------------------------------------------------------------
def self_attention_ref(x_nchw, wf, bf, wg, bg, wh, bh, gamma):
    B, C, H, W = x_nchw.shape
    N = H * W
    hp = jax.lax.Precision.HIGHEST
    xf = x_nchw.reshape(B, C, N)
    f = jnp.einsum("kc,bcn->bkn", wf, xf, precision=hp) + bf[None, :, None]
    g = jnp.einsum("kc,bcn->bkn", wg, xf, precision=hp) + bg[None, :, None]
    h = jnp.einsum("kc,bcn->bkn", wh, xf, precision=hp) + bh[None, :, None]
    s = jnp.einsum("bki,bkj->bij", f, g, precision=hp)          # (B, N, N)
    beta = jax.nn.softmax(s, axis=1)                            # torch dim=1
    o = jnp.einsum("bci,bij->bcj", h, beta, precision=hp)       # (B, C, N)
    return (gamma * o + xf).reshape(B, C, H, W)


# ----------------------------------------------------------------------------
# Deterministic parameters (shapes from SelfAttention.__init__)
# ----------------------------------------------------------------------------
def make_params(key, C):
    C8 = C // 8
    ks = jax.random.split(key, 6)
    wf = 0.1 * jax.random.normal(ks[0], (C8, C), jnp.float32)
    bf = 0.1 * jax.random.normal(ks[1], (C8,), jnp.float32)
    wg = 0.1 * jax.random.normal(ks[2], (C8, C), jnp.float32)
    bg = 0.1 * jax.random.normal(ks[3], (C8,), jnp.float32)
    wh = 0.1 * jax.random.normal(ks[4], (C, C), jnp.float32)
    bh = 0.1 * jax.random.normal(ks[5], (C,), jnp.float32)
    # PyTorch inits gamma to 0; use 0.5 so the attention path is exercised.
    gamma = 0.5
    return wf, bf, wg, bg, wh, bh, gamma


if __name__ == "__main__":
    B, C, H, W = 2, 16, 16, 16          # C must be a multiple of 8

    key = jax.random.PRNGKey(0)
    kx, kp = jax.random.split(key)
    x = jax.random.normal(kx, (B, C, H, W), jnp.float32)     # NCHW like PyTorch
    wf, bf, wg, bg, wh, bh, gamma = make_params(kp, C)

    fwd = jax.jit(self_attention)
    y = jax.block_until_ready(fwd(x, wf, bf, wg, bg, wh, bh, gamma))
    assert y.shape == (B, C, H, W), y.shape

    y_ref = jax.block_until_ready(
        self_attention_ref(x, wf, bf, wg, bg, wh, bh, gamma))
    max_err = float(jnp.max(jnp.abs(y - y_ref)))
    assert jnp.allclose(y, y_ref, atol=5e-2, rtol=5e-2), max_err

    print("KERNEL_OK")
</pallas_src>

<mosaic_0001>
module attributes {stable_mosaic.version = 11 : i64} {
  func.func @_self_attention_kernel(%arg0: i32, %arg1: memref<2x16x256xf32, #tpu.memory_space<vmem>>, %arg2: memref<32x16xbf16, #tpu.memory_space<vmem>>, %arg3: memref<32x1xf32, #tpu.memory_space<vmem>>, %arg4: memref<2x16x256xf32, #tpu.memory_space<vmem>>) attributes {dimension_semantics = [#tpu.dimension_semantics<parallel>], iteration_bounds = array<i64: 1>, scalar_prefetch = 0 : i64, scratch_operands = 0 : i64, tpu.core_type = #tpu.core_type<tc>, window_params = [{transform_indices = @transform_0, window_bounds = array<i64: 2, 16, 256>}, {pipeline_mode = #tpu.pipeline_mode<synchronous>, transform_indices = @transform_1, window_bounds = array<i64: 32, 16>}, {pipeline_mode = #tpu.pipeline_mode<synchronous>, transform_indices = @transform_2, window_bounds = array<i64: 32, 1>}, {transform_indices = @transform_3, window_bounds = array<i64: 2, 16, 256>}]} {
    %c0 = arith.constant 0 : index
    %c0_0 = arith.constant 0 : index
    %0 = vector.load %arg2[%c0, %c0_0] : memref<32x16xbf16, #tpu.memory_space<vmem>>, vector<32x16xbf16>
    %c0_1 = arith.constant 0 : index
    %c0_2 = arith.constant 0 : index
    %1 = vector.load %arg3[%c0_1, %c0_2] : memref<32x1xf32, #tpu.memory_space<vmem>>, vector<32x1xf32>
    %c0_3 = arith.constant 0 : index
    %c0_4 = arith.constant 0 : index
    %c0_5 = arith.constant 0 : index
    %2 = vector.load %arg1[%c0_3, %c0_4, %c0_5] : memref<2x16x256xf32, #tpu.memory_space<vmem>>, vector<1x16x256xf32>
    %3 = vector.shape_cast %2 : vector<1x16x256xf32> to vector<16x256xf32>
    %4 = arith.truncf %3 : vector<16x256xf32> to vector<16x256xbf16>
    %cst = arith.constant dense<0.000000e+00> : vector<32x256xf32>
    %5 = tpu.matmul %0, %4, %cst {dimension_numbers = #tpu.dot_dimension_numbers<[1], [0], [0], [1], [0, 0, 1, 1], [], []>} : vector<32x16xbf16>, vector<16x256xbf16>, vector<32x256xf32> -> vector<32x256xf32>
    %6 = vector.broadcast %1 : vector<32x1xf32> to vector<32x256xf32>
    %7 = arith.addf %5, %6 : vector<32x256xf32>
    %8 = vector.extract_strided_slice %7 {offsets = [0, 0], sizes = [16, 256], strides = [1, 1]} : vector<32x256xf32> to vector<16x256xf32>
    %9 = vector.extract_strided_slice %7 {offsets = [16, 0], sizes = [8, 256], strides = [1, 1]} : vector<32x256xf32> to vector<8x256xf32>
    %10 = vector.extract_strided_slice %7 {offsets = [24, 0], sizes = [8, 256], strides = [1, 1]} : vector<32x256xf32> to vector<8x256xf32>
    %11 = arith.truncf %9 : vector<8x256xf32> to vector<8x256xbf16>
    %12 = arith.truncf %10 : vector<8x256xf32> to vector<8x256xbf16>
    %cst_6 = arith.constant dense<0.000000e+00> : vector<256x256xf32>
    %13 = tpu.matmul %11, %12, %cst_6 {dimension_numbers = #tpu.dot_dimension_numbers<[0], [0], [1], [1], [0, 1, 1, 1], [], []>} : vector<8x256xbf16>, vector<8x256xbf16>, vector<256x256xf32> -> vector<256x256xf32>
    %cst_7 = arith.constant dense<0xFF800000> : vector<256xf32>
    %14 = vector.multi_reduction <maximumf>, %13, %cst_7 [0] : vector<256x256xf32> to vector<256xf32>
    %15 = vector.shape_cast %14 : vector<256xf32> to vector<1x256xf32>
    %16 = vector.broadcast %15 : vector<1x256xf32> to vector<256x256xf32>
    %17 = arith.subf %13, %16 : vector<256x256xf32>
    %18 = math.exp %17 : vector<256x256xf32>
    %cst_8 = arith.constant dense<0.000000e+00> : vector<256xf32>
    %19 = vector.multi_reduction <add>, %18, %cst_8 [0] : vector<256x256xf32> to vector<256xf32>
    %20 = vector.shape_cast %19 : vector<256xf32> to vector<1x256xf32>
    %21 = arith.truncf %8 : vector<16x256xf32> to vector<16x256xbf16>
    %22 = arith.truncf %18 : vector<256x256xf32> to vector<256x256xbf16>
    %cst_9 = arith.constant dense<0.000000e+00> : vector<16x256xf32>
    %23 = tpu.matmul %21, %22, %cst_9 {dimension_numbers = #tpu.dot_dimension_numbers<[1], [0], [0], [1], [0, 0, 1, 1], [], []>} : vector<16x256xbf16>, vector<256x256xbf16>, vector<16x256xf32> -> vector<16x256xf32>
    %24 = tpu.reciprocal %20 {approx = true} : vector<1x256xf32> -> vector<1x256xf32>
    %25 = vector.broadcast %24 : vector<1x256xf32> to vector<16x256xf32>
    %26 = arith.mulf %23, %25 : vector<16x256xf32>
    %27 = arith.addf %26, %3 : vector<16x256xf32>
    %c0_10 = arith.constant 0 : index
    %c0_11 = arith.constant 0 : index
    %c0_12 = arith.constant 0 : index
    %28 = vector.load %arg4[%c0_10, %c0_11, %c0_12] : memref<2x16x256xf32, #tpu.memory_space<vmem>>, vector<1x16x256xf32>
    %29 = vector.shape_cast %28 : vector<1x16x256xf32> to vector<16x256xf32>
    %30 = vector.shape_cast %27 : vector<16x256xf32> to vector<1x16x256xf32>
    tpu.vector_store %arg4[%c0_10, %c0_11, %c0_12], %30 {strides = array<i32>} : memref<2x16x256xf32, #tpu.memory_space<vmem>>, vector<1x16x256xf32>,
    %c1 = arith.constant 1 : index
    %c0_13 = arith.constant 0 : index
    %c0_14 = arith.constant 0 : index
    %31 = vector.load %arg1[%c1, %c0_13, %c0_14] : memref<2x16x256xf32, #tpu.memory_space<vmem>>, vector<1x16x256xf32>
    %32 = vector.shape_cast %31 : vector<1x16x256xf32> to vector<16x256xf32>
    %33 = arith.truncf %32 : vector<16x256xf32> to vector<16x256xbf16>
    %cst_15 = arith.constant dense<0.000000e+00> : vector<32x256xf32>
    %34 = tpu.matmul %0, %33, %cst_15 {dimension_numbers = #tpu.dot_dimension_numbers<[1], [0], [0], [1], [0, 0, 1, 1], [], []>} : vector<32x16xbf16>, vector<16x256xbf16>, vector<32x256xf32> -> vector<32x256xf32>
    %35 = vector.broadcast %1 : vector<32x1xf32> to vector<32x256xf32>
    %36 = arith.addf %34, %35 : vector<32x256xf32>
    %37 = vector.extract_strided_slice %36 {offsets = [0, 0], sizes = [16, 256], strides = [1, 1]} : vector<32x256xf32> to vector<16x256xf32>
    %38 = vector.extract_strided_slice %36 {offsets = [16, 0], sizes = [8, 256], strides = [1, 1]} : vector<32x256xf32> to vector<8x256xf32>
    %39 = vector.extract_strided_slice %36 {offsets = [24, 0], sizes = [8, 256], strides = [1, 1]} : vector<32x256xf32> to vector<8x256xf32>
    %40 = arith.truncf %38 : vector<8x256xf32> to vector<8x256xbf16>
    %41 = arith.truncf %39 : vector<8x256xf32> to vector<8x256xbf16>
    %cst_16 = arith.constant dense<0.000000e+00> : vector<256x256xf32>
    %42 = tpu.matmul %40, %41, %cst_16 {dimension_numbers = #tpu.dot_dimension_numbers<[0], [0], [1], [1], [0, 1, 1, 1], [], []>} : vector<8x256xbf16>, vector<8x256xbf16>, vector<256x256xf32> -> vector<256x256xf32>
    %cst_17 = arith.constant dense<0xFF800000> : vector<256xf32>
    %43 = vector.multi_reduction <maximumf>, %42, %cst_17 [0] : vector<256x256xf32> to vector<256xf32>
    %44 = vector.shape_cast %43 : vector<256xf32> to vector<1x256xf32>
    %45 = vector.broadcast %44 : vector<1x256xf32> to vector<256x256xf32>
    %46 = arith.subf %42, %45 : vector<256x256xf32>
    %47 = math.exp %46 : vector<256x256xf32>
    %cst_18 = arith.constant dense<0.000000e+00> : vector<256xf32>
    %48 = vector.multi_reduction <add>, %47, %cst_18 [0] : vector<256x256xf32> to vector<256xf32>
    %49 = vector.shape_cast %48 : vector<256xf32> to vector<1x256xf32>
    %50 = arith.truncf %37 : vector<16x256xf32> to vector<16x256xbf16>
    %51 = arith.truncf %47 : vector<256x256xf32> to vector<256x256xbf16>
    %cst_19 = arith.constant dense<0.000000e+00> : vector<16x256xf32>
    %52 = tpu.matmul %50, %51, %cst_19 {dimension_numbers = #tpu.dot_dimension_numbers<[1], [0], [0], [1], [0, 0, 1, 1], [], []>} : vector<16x256xbf16>, vector<256x256xbf16>, vector<16x256xf32> -> vector<16x256xf32>
    %53 = tpu.reciprocal %49 {approx = true} : vector<1x256xf32> -> vector<1x256xf32>
    %54 = vector.broadcast %53 : vector<1x256xf32> to vector<16x256xf32>
    %55 = arith.mulf %52, %54 : vector<16x256xf32>
    %56 = arith.addf %55, %32 : vector<16x256xf32>
    %c1_20 = arith.constant 1 : index
    %c0_21 = arith.constant 0 : index
    %c0_22 = arith.constant 0 : index
    %57 = vector.load %arg4[%c1_20, %c0_21, %c0_22] : memref<2x16x256xf32, #tpu.memory_space<vmem>>, vector<1x16x256xf32>
    %58 = vector.shape_cast %57 : vector<1x16x256xf32> to vector<16x256xf32>
    %59 = vector.shape_cast %56 : vector<16x256xf32> to vector<1x16x256xf32>
    tpu.vector_store %arg4[%c1_20, %c0_21, %c0_22], %59 {strides = array<i32>} : memref<2x16x256xf32, #tpu.memory_space<vmem>>, vector<1x16x256xf32>,
    return
  }
  func.func @transform_0(%arg0: i32) -> (i32, i32, i32) {
    %c0_i32 = arith.constant 0 : i32
    %c0_i32_0 = arith.constant 0 : i32
    %c0_i32_1 = arith.constant 0 : i32
    return %arg0, %c0_i32, %c0_i32_0 : i32, i32, i32
  }
  func.func @transform_1(%arg0: i32) -> (i32, i32) {
    %c0_i32 = arith.constant 0 : i32
    %c0_i32_0 = arith.constant 0 : i32
    %c0_i32_1 = arith.constant 0 : i32
    return %c0_i32, %c0_i32_0 : i32, i32
  }
  func.func @transform_2(%arg0: i32) -> (i32, i32) {
    %c0_i32 = arith.constant 0 : i32
    %c0_i32_0 = arith.constant 0 : i32
    %c0_i32_1 = arith.constant 0 : i32
    return %c0_i32, %c0_i32_0 : i32, i32
  }
  func.func @transform_3(%arg0: i32) -> (i32, i32, i32) {
    %c0_i32 = arith.constant 0 : i32
    %c0_i32_0 = arith.constant 0 : i32
    %c0_i32_1 = arith.constant 0 : i32
    return %arg0, %c0_i32, %c0_i32_0 : i32, i32, i32
  }
}

</mosaic_0001>

<llo_original>
// kernel: self_attention.1
$region0: #{self_attention.1}
  #allocation0 [shape = 'u32[]', space=smem, size = 0x4, offset = 0x4, fixed_abs, tag = 'smem constant byte address 0x4 - core index']
  #allocation1 [shape = 'u32[144,128]{1,0:T(1,128)}', space=vmem, size = 0x12000, scoped, tag = 'internal scratch']
  %s0 = inlined_call_operand.vmem [shape: f32[2,16,256], index: 0, kind: input, shape index: {}]
  %s1 = inlined_call_operand.vmem [shape: bf16[32,16], index: 1, kind: input, shape index: {}]
  %s2 = inlined_call_operand.vmem [shape: f32[32,1], index: 2, kind: input, shape index: {}]
  %s3 = inlined_call_operand.vmem [shape: f32[2,16,256], index: 3, kind: output, shape index: {}]
  %s4 = sld [smem:[#allocation0]]
  $region22: #{self_attention.1} parent=0
    _
  %s6 = ssub.s32 1, %s4
  %s7 = scalar_select 0, %s6, %s4
  // Predicated region
  $region2: #{self_attention.1} parent=0 // pred_check
    _
  $region3: #{self_attention.1} parent=0 // pred_check_branch
    %9 = sbr.rel (0) target = $region5
  $region4: #{self_attention.1} parent=0 // pred_region
    _
  $region5: #{self_attention.1} parent=0 // pred_fallthru
    _
  // Predicated region
  $region6: #{self_attention.1} parent=0 // pred_check
    _
  $region7: #{self_attention.1} parent=0 // pred_check_branch
    %11 = sbr.rel (0) target = $region9
  $region8: #{self_attention.1} parent=0 // pred_region
    _
  $region9: #{self_attention.1} parent=0 // pred_fallthru
    _
  // Predicated region
  $region10: #{self_attention.1} parent=0 // pred_check
    _
  $region11: #{self_attention.1} parent=0 // pred_check_branch
    %13 = sbr.rel (0) target = $region13
  $region12: #{self_attention.1} parent=0 // pred_region
    _
  $region13: #{self_attention.1} parent=0 // pred_fallthru
    _
  %v15 = vld [vmem:[%s1] sm:$0xf]
  %v16 = vld [vmem:[%s1 + $0x4] sm:$0xf]
  %v17 = vld [vmem:[%s1 + $0x8] sm:$0xf]
  %v18 = vld [vmem:[%s1 + $0xc] sm:$0xf]
  %v19 = vld [vmem:[%s2] sm:$0xff]
  %v20 = vld [vmem:[%s2 + $0x8] sm:$0xff]
  %v21 = vld [vmem:[%s2 + $0x10] sm:$0xff]
  %v22 = vld [vmem:[%s2 + $0x18] sm:$0xff]
  %v23 = vld [vmem:[%s0] sm:$0xff]
  %v24 = vld [vmem:[%s0 + $0x8] sm:$0xff]
  %v25 = vld [vmem:[%s0 + $0x10] sm:$0xff]
  %v26 = vld [vmem:[%s0 + $0x18] sm:$0xff]
  %v27 = vpack.c.bf16 %v25, %v23
  %v28 = vpack.c.bf16 %v26, %v24
  %30 = vset.pattern.permute.xlu0 0
  %31 = vperm.xlu0 %30, %v19
  %v32 = vpop.permute.xlu0 %31
  %35 = vset.pattern.permute.xlu0 0
  %36 = vperm.xlu0 %35, %v20
  %v37 = vpop.permute.xlu0 %36
  %40 = vset.pattern.permute.xlu0 0
  %41 = vperm.xlu0 %40, %v21
  %v42 = vpop.permute.xlu0 %41
  %45 = vset.pattern.permute.xlu0 0
  %46 = vperm.xlu0 %45, %v22
  %v47 = vpop.permute.xlu0 %46
  %v53 = vunpack.c.l.b16 %v15
  %v54 = vunpack.c.l.b16 %v16
  %v55 = vunpack.c.l.b16 %v17
  %v56 = vunpack.c.l.b16 %v18
  %v57 = vpack.c.b16 %v54, %v53
  %v58 = vpack.c.b16 %v56, %v55
  %vm59 = vcmask 130048
  %v61 = vsel %vm59, %v57, 0
  %v64 = vsel %vm59, %v58, 0
  %66 = vmatprep.subr.bf16.mxu0 %v28
  %67 = vmatpush1.bf16.msra.mxu0 %v27
  %68 = vmatprep.subr.bf16.mxu0 0
  %69 = vmatpush1.bf16.msra.mxu0 0
  %70 = vmatprep.subr.bf16.mxu0 0
  %71 = vmatpush1.bf16.msra.mxu0 0
  %72 = vmatprep.subr.bf16.mxu0 0
  %73 = vmatpush1.bf16.msra.mxu0 0
  %74 = vmatprep.subr.bf16.mxu0 0
  %75 = vmatpush1.bf16.msra.mxu0 0
  %76 = vmatprep.subr.bf16.mxu0 0
  %77 = vmatpush1.bf16.msra.mxu0 0
  %78 = vmatprep.subr.bf16.mxu0 0
  %79 = vmatpush1.bf16.msra.mxu0 0
  %80 = vmatprep.subr.bf16.mxu0 0
  %81 = vmatpush1.bf16.msra.mxu0 0
  %82 = vmatprep.subr.bf16.mxu0 0
  %83 = vmatpush1.bf16.msra.mxu0 0
  %84 = vmatprep.subr.bf16.mxu0 0
  %85 = vmatpush1.bf16.msra.mxu0 0
  %86 = vmatprep.subr.bf16.mxu0 0
  %87 = vmatpush1.bf16.msra.mxu0 0
  %88 = vmatprep.subr.bf16.mxu0 0
  %89 = vmatpush1.bf16.msra.mxu0 0
  %90 = vmatprep.subr.bf16.mxu0 0
  %91 = vmatpush1.bf16.msra.mxu0 0
  %92 = vmatprep.subr.bf16.mxu0 0
  %93 = vmatpush1.bf16.msra.mxu0 0
  %94 = vmatprep.subr.bf16.mxu0 0
  %95 = vmatpush1.bf16.msra.mxu0 0
  %96 = vmatprep.subr.bf16.mxu0 0
  %97 = vmatpush1.bf16.msra.mxu0 0
  %98 = vmatprep.mubr.bf16.mxu0 0
  %99 = vmatmul.mubr.bf16.gmra.mrb[0].mxu0 %v61
  %v100 = vpop.f32.mrb[0].mxu0
  %v101 = vadd.f32 %v32, %v100
  %v102 = vpop.f32.mrb[0].mxu0
  %v103 = vadd.f32 %v32, %v102
  %v104 = vpop.f32.mrb[0].mxu0
  %v105 = vadd.f32 %v37, %v104
  %v106 = vpop.f32.mrb[0].mxu0
  %v107 = vadd.f32 %v37, %v106
  %108 = vmatprep.mubr.bf16.mxu0 0
  %109 = vmatmul.mubr.bf16.gmra.mrb[0].mxu0 %v64
  %v110 = vpop.f32.mrb[0].mxu0
  %v111 = vadd.f32 %v42, %v110
  %v112 = vpop.f32.mrb[0].mxu0
  %v113 = vadd.f32 %v42, %v112
  %v114 = vpop.f32.mrb[0].mxu0
  %v115 = vadd.f32 %v47, %v114
  %v116 = vpop.f32.mrb[0].mxu0
  %v117 = vadd.f32 %v47, %v116
  %118 = vdwg.mxu0
  %v119 = vpack.c.bf16 %v111, %v111
  %v120 = vpack.c.bf16 %v113, %v113
  %v121 = vpack.c.bf16 %v115, %v115
  %v122 = vpack.c.bf16 %v117, %v117
  %123 = vxpose.xlu0.c.b16.start [1/8] %v119, 128
  %124 = vxpose.xlu0.c.b16.cont [2/8] 0, 128
  %125 = vxpose.xlu0.c.b16.cont [3/8] 0, 128
  %126 = vxpose.xlu0.c.b16.cont [4/8] 0, 128
  %127 = vxpose.xlu0.c.b16.cont [5/8] 0, 128
  %128 = vxpose.xlu0.c.b16.cont [6/8] 0, 128
  %129 = vxpose.xlu0.c.b16.cont [7/8] 0, 128
  %130 = vxpose.xlu0.c.b16.end [8/8] 0, 128
  %v131 = vpop.trf.xlu0
  %v132 = vpop.trf.xlu0
  %v133 = vpop.trf.xlu0
  %v134 = vpop.trf.xlu0
  %v135 = vpop.trf.xlu0
  %v136 = vpop.trf.xlu0
  %v137 = vpop.trf.xlu0
  %v138 = vpop.trf.xlu0
  %139 = vxpose.xlu0.c.b16.start [1/8] %v120, 128
  %140 = vxpose.xlu0.c.b16.cont [2/8] 0, 128
  %141 = vxpose.xlu0.c.b16.cont [3/8] 0, 128
  %142 = vxpose.xlu0.c.b16.cont [4/8] 0, 128
  %143 = vxpose.xlu0.c.b16.cont [5/8] 0, 128
  %144 = vxpose.xlu0.c.b16.cont [6/8] 0, 128
  %145 = vxpose.xlu0.c.b16.cont [7/8] 0, 128
  %146 = vxpose.xlu0.c.b16.end [8/8] 0, 128
  %v147 = vpop.trf.xlu0
  %v148 = vpop.trf.xlu0
  %v149 = vpop.trf.xlu0
  %v150 = vpop.trf.xlu0
  %v151 = vpop.trf.xlu0
  %v152 = vpop.trf.xlu0
  %v153 = vpop.trf.xlu0
  %v154 = vpop.trf.xlu0
  %vm155 = vcmask 64512
  %v157 = vsel %vm155, %v131, 0
  %v160 = vsel %vm155, %v132, 0
  %v163 = vsel %vm155, %v133, 0
  %v166 = vsel %vm155, %v134, 0
  %v169 = vsel %vm155, %v135, 0
  %v172 = vsel %vm155, %v136, 0
  %v175 = vsel %vm155, %v137, 0
  %v178 = vsel %vm155, %v138, 0
  %v181 = vsel %vm155, %v147, 0
  %v184 = vsel %vm155, %v148, 0
  %v187 = vsel %vm155, %v149, 0
  %v190 = vsel %vm155, %v150, 0
  %v193 = vsel %vm155, %v151, 0
  %v196 = vsel %vm155, %v152, 0
  %v199 = vsel %vm155, %v153, 0
  %v202 = vsel %vm155, %v154, 0
  %vm204 = vcmask 1043456
  %v206 = vsel %vm204, %v121, 0
  %v209 = vsel %vm204, %v122, 0
  %211 = vmatprep.subr.bf16.mxu0 %v209
  %212 = vmatpush1.bf16.msra.mxu0 %v206
  %213 = vmatprep.subr.bf16.mxu0 0
  %214 = vmatpush1.bf16.msra.mxu0 0
  %215 = vmatprep.subr.bf16.mxu0 0
  %216 = vmatpush1.bf16.msra.mxu0 0
  %217 = vmatprep.subr.bf16.mxu0 0
  %218 = vmatpush1.bf16.msra.mxu0 0
  %219 = vmatprep.subr.bf16.mxu0 0
  %220 = vmatpush1.bf16.msra.mxu0 0
  %221 = vmatprep.subr.bf16.mxu0 0
  %222 = vmatpush1.bf16.msra.mxu0 0
  %223 = vmatprep.subr.bf16.mxu0 0
  %224 = vmatpush1.bf16.msra.mxu0 0
  %225 = vmatprep.subr.bf16.mxu0 0
  %226 = vmatpush1.bf16.msra.mxu0 0
  %227 = vmatprep.subr.bf16.mxu0 0
  %228 = vmatpush1.bf16.msra.mxu0 0
  %229 = vmatprep.subr.bf16.mxu0 0
  %230 = vmatpush1.bf16.msra.mxu0 0
  %231 = vmatprep.subr.bf16.mxu0 0
  %232 = vmatpush1.bf16.msra.mxu0 0
  %233 = vmatprep.subr.bf16.mxu0 0
  %234 = vmatpush1.bf16.msra.mxu0 0
  %235 = vmatprep.subr.bf16.mxu0 0
  %236 = vmatpush1.bf16.msra.mxu0 0
  %237 = vmatprep.subr.bf16.mxu0 0
  %238 = vmatpush1.bf16.msra.mxu0 0
  %239 = vmatprep.subr.bf16.mxu0 0
  %240 = vmatpush1.bf16.msra.mxu0 0
  %241 = vmatprep.subr.bf16.mxu0 0
  %242 = vmatpush1.bf16.msra.mxu0 0
  %243 = vmatprep.mubr.bf16.mxu0 0
  %244 = vmatmul.mubr.bf16.gmra.mrb[0].mxu0 %v157
  %v245 = vpop.f32.mrb[0].mxu0
  %v246 = vadd.f32 0.0, %v245
  %v247 = vpop.f32.mrb[0].mxu0
  %v248 = vadd.f32 0.0, %v247
  %v249 = vpop.f32.mrb[0].mxu0
  %v250 = vadd.f32 0.0, %v249
  %v251 = vpop.f32.mrb[0].mxu0
  %v252 = vadd.f32 0.0, %v251
  %253 = vmatprep.mubr.bf16.mxu0 0
  %254 = vmatmul.mubr.bf16.gmra.mrb[0].mxu0 %v160
  %v255 = vpop.f32.mrb[0].mxu0
  %v256 = vadd.f32 0.0, %v255
  %v257 = vpop.f32.mrb[0].mxu0
  %v258 = vadd.f32 0.0, %v257
  %v259 = vpop.f32.mrb[0].mxu0
  %v260 = vadd.f32 0.0, %v259
  %v261 = vpop.f32.mrb[0].mxu0
  %v262 = vadd.f32 0.0, %v261
  %263 = vmatprep.mubr.bf16.mxu0 0
  %264 = vmatmul.mubr.bf16.gmra.mrb[0].mxu0 %v163
  %v265 = vpop.f32.mrb[0].mxu0
  %v266 = vadd.f32 0.0, %v265
  %v267 = vpop.f32.mrb[0].mxu0
  %v268 = vadd.f32 0.0, %v267
  %v269 = vpop.f32.mrb[0].mxu0
  %v270 = vadd.f32 0.0, %v269
  %v271 = vpop.f32.mrb[0].mxu0
  %v272 = vadd.f32 0.0, %v271
  %273 = vmatprep.mubr.bf16.mxu0 0
  %274 = vmatmul.mubr.bf16.gmra.mrb[0].mxu0 %v166
  %v275 = vpop.f32.mrb[0].mxu0
  %v276 = vadd.f32 0.0, %v275
  %v277 = vpop.f32.mrb[0].mxu0
  %v278 = vadd.f32 0.0, %v277
  %v279 = vpop.f32.mrb[0].mxu0
  %v280 = vadd.f32 0.0, %v279
  %v281 = vpop.f32.mrb[0].mxu0
  %v282 = vadd.f32 0.0, %v281
  %283 = vmatprep.mubr.bf16.mxu0 0
  %284 = vmatmul.mubr.bf16.gmra.mrb[0].mxu0 %v169
  %v285 = vpop.f32.mrb[0].mxu0
  %v286 = vadd.f32 0.0, %v285
  %v287 = vpop.f32.mrb[0].mxu0
  %v288 = vadd.f32 0.0, %v287
  %v289 = vpop.f32.mrb[0].mxu0
  %v290 = vadd.f32 0.0, %v289
  %v291 = vpop.f32.mrb[0].mxu0
  %v292 = vadd.f32 0.0, %v291
  %293 = vmatprep.mubr.bf16.mxu0 0
  %294 = vmatmul.mubr.bf16.gmra.mrb[0].mxu0 %v172
  %v295 = vpop.f32.mrb[0].mxu0
  %v296 = vadd.f32 0.0, %v295
  %v297 = vpop.f32.mrb[0].mxu0
  %v298 = vadd.f32 0.0, %v297
  %v299 = vpop.f32.mrb[0].mxu0
  %v300 = vadd.f32 0.0, %v299
  %v301 = vpop.f32.mrb[0].mxu0
  %v302 = vadd.f32 0.0, %v301
  %303 = vmatprep.mubr.bf16.mxu0 0
  %304 = vmatmul.mubr.bf16.gmra.mrb[0].mxu0 %v175
  %v305 = vpop.f32.mrb[0].mxu0
  %v306 = vadd.f32 0.0, %v305
  %v307 = vpop.f32.mrb[0].mxu0
  %v308 = vadd.f32 0.0, %v307
  %v309 = vpop.f32.mrb[0].mxu0
  %v310 = vadd.f32 0.0, %v309
  %v311 = vpop.f32.mrb[0].mxu0
  %v312 = vadd.f32 0.0, %v311
  %313 = vmatprep.mubr.bf16.mxu0 0
  %314 = vmatmul.mubr.bf16.gmra.mrb[0].mxu0 %v178
  %v315 = vpop.f32.mrb[0].mxu0
  %v316 = vadd.f32 0.0, %v315
  %v317 = vpop.f32.mrb[0].mxu0
  %v318 = vadd.f32 0.0, %v317
  %v319 = vpop.f32.mrb[0].mxu0
  %v320 = vadd.f32 0.0, %v319
  %v321 = vpop.f32.mrb[0].mxu0
  %v322 = vadd.f32 0.0, %v321
  %323 = vmatprep.mubr.bf16.mxu0 0
  %324 = vmatmul.mubr.bf16.gmra.mrb[0].mxu0 %v181
  %v325 = vpop.f32.mrb[0].mxu0
  %v326 = vadd.f32 0.0, %v325
  %v327 = vpop.f32.mrb[0].mxu0
  %v328 = vadd.f32 0.0, %v327
  %v329 = vpop.f32.mrb[0].mxu0
  %v330 = vadd.f32 0.0, %v329
  %v331 = vpop.f32.mrb[0].mxu0
  %v332 = vadd.f32 0.0, %v331
  %333 = vmatprep.mubr.bf16.mxu0 0
  %334 = vmatmul.mubr.bf16.gmra.mrb[0].mxu0 %v184
  %v335 = vpop.f32.mrb[0].mxu0
  %v336 = vadd.f32 0.0, %v335
  %v337 = vpop.f32.mrb[0].mxu0
  %v338 = vadd.f32 0.0, %v337
  %v339 = vpop.f32.mrb[0].mxu0
  %v340 = vadd.f32 0.0, %v339
  %v341 = vpop.f32.mrb[0].mxu0
  %v342 = vadd.f32 0.0, %v341
  %343 = vmatprep.mubr.bf16.mxu0 0
  %344 = vmatmul.mubr.bf16.gmra.mrb[0].mxu0 %v187
  %v345 = vpop.f32.mrb[0].mxu0
  %v346 = vadd.f32 0.0, %v345
  %v347 = vpop.f32.mrb[0].mxu0
  %v348 = vadd.f32 0.0, %v347
  %v349 = vpop.f32.mrb[0].mxu0
  %v350 = vadd.f32 0.0, %v349
  %v351 = vpop.f32.mrb[0].mxu0
  %v352 = vadd.f32 0.0, %v351
  %353 = vmatprep.mubr.bf16.mxu0 0
  %354 = vmatmul.mubr.bf16.gmra.mrb[0].mxu0 %v190
  %v355 = vpop.f32.mrb[0].mxu0
  %v356 = vadd.f32 0.0, %v355
  %v357 = vpop.f32.mrb[0].mxu0
  %v358 = vadd.f32 0.0, %v357
  %v359 = vpop.f32.mrb[0].mxu0
  %v360 = vadd.f32 0.0, %v359
  %v361 = vpop.f32.mrb[0].mxu0
  %v362 = vadd.f32 0.0, %v361
  %363 = vmatprep.mubr.bf16.mxu0 0
  %364 = vmatmul.mubr.bf16.gmra.mrb[0].mxu0 %v193
  %v365 = vpop.f32.mrb[0].mxu0
  %v366 = vadd.f32 0.0, %v365
  %v367 = vpop.f32.mrb[0].mxu0
  %v368 = vadd.f32 0.0, %v367
  %v369 = vpop.f32.mrb[0].mxu0
  %v370 = vadd.f32 0.0, %v369
  %v371 = vpop.f32.mrb[0].mxu0
  %v372 = vadd.f32 0.0, %v371
  %373 = vmatprep.mubr.bf16.mxu0 0
  %374 = vmatmul.mubr.bf16.gmra.mrb[0].mxu0 %v196
  %v375 = vpop.f32.mrb[0].mxu0
  %v376 = vadd.f32 0.0, %v375
  %v377 = vpop.f32.mrb[0].mxu0
  %v378 = vadd.f32 0.0, %v377
  %v379 = vpop.f32.mrb[0].mxu0
  %v380 = vadd.f32 0.0, %v379
  %v381 = vpop.f32.mrb[0].mxu0
  %v382 = vadd.f32 0.0, %v381
  %383 = vmatprep.mubr.bf16.mxu0 0
  %384 = vmatmul.mubr.bf16.gmra.mrb[0].mxu0 %v199
  %v385 = vpop.f32.mrb[0].mxu0
  %v386 = vadd.f32 0.0, %v385
  %v387 = vpop.f32.mrb[0].mxu0
  %v388 = vadd.f32 0.0, %v387
  %v389 = vpop.f32.mrb[0].mxu0
  %v390 = vadd.f32 0.0, %v389
  %v391 = vpop.f32.mrb[0].mxu0
  %v392 = vadd.f32 0.0, %v391
  %393 = vmatprep.mubr.bf16.mxu0 0
  %394 = vmatmul.mubr.bf16.gmra.mrb[0].mxu0 %v202
  %v395 = vpop.f32.mrb[0].mxu0
  %v396 = vadd.f32 0.0, %v395
  %v397 = vpop.f32.mrb[0].mxu0
  %v398 = vadd.f32 0.0, %v397
  %v399 = vpop.f32.mrb[0].mxu0
  %v400 = vadd.f32 0.0, %v399
  %v401 = vpop.f32.mrb[0].mxu0
  %v402 = vadd.f32 0.0, %v401
  %403 = vdwg.mxu0
  %v404 = vmax.f32 %v246, %v256
  %v405 = vmax.f32 %v250, %v260
  %v406 = vmax.f32 %v404, %v266
  %v407 = vmax.f32 %v405, %v270
  %v408 = vmax.f32 %v406, %v276
  %v409 = vmax.f32 %v407, %v280
  %v410 = vmax.f32 %v408, %v286
  %v411 = vmax.f32 %v409, %v290
  %v412 = vmax.f32 %v410, %v296
  %v413 = vmax.f32 %v411, %v300
  %v414 = vmax.f32 %v412, %v306
  %v415 = vmax.f32 %v413, %v310
  %v416 = vmax.f32 %v414, %v316
  %v417 = vmax.f32 %v415, %v320
  %v418 = vmax.f32 %v416, %v326
  %v419 = vmax.f32 %v417, %v330
  %v420 = vmax.f32 %v418, %v336
  %v421 = vmax.f32 %v419, %v340
  %v422 = vmax.f32 %v420, %v346
  %v423 = vmax.f32 %v421, %v350
  %v424 = vmax.f32 %v422, %v356
  %v425 = vmax.f32 %v423, %v360
  %v426 = vmax.f32 %v424, %v366
  %v427 = vmax.f32 %v425, %v370
  %v428 = vmax.f32 %v426, %v376
  %v429 = vmax.f32 %v427, %v380
  %v430 = vmax.f32 %v428, %v386
  %v431 = vmax.f32 %v429, %v390
  %v432 = vmax.f32 %v430, %v396
  %v433 = vmax.f32 %v431, %v400
  %v434 = vmax.f32 %v432, %v433
  %v435 = vrot.slane %v434, 4
  %v436 = vmax.f32 %v434, %v435
  %v437 = vrot.slane %v436, 2
  %v438 = vmax.f32 %v436, %v437
  %v439 = vrot.slane %v438, 1
  %v440 = vmax.f32 %v438, %v439
  %v441 = vmax.f32 %v248, %v258
  %v442 = vmax.f32 %v252, %v262
  %v443 = vmax.f32 %v441, %v268
  %v444 = vmax.f32 %v442, %v272
  %v445 = vmax.f32 %v443, %v278
  %v446 = vmax.f32 %v444, %v282
  %v447 = vmax.f32 %v445, %v288
  %v448 = vmax.f32 %v446, %v292
  %v449 = vmax.f32 %v447, %v298
  %v450 = vmax.f32 %v448, %v302
  %v451 = vmax.f32 %v449, %v308
  %v452 = vmax.f32 %v450, %v312
  %v453 = vmax.f32 %v451, %v318
  %v454 = vmax.f32 %v452, %v322
  %v455 = vmax.f32 %v453, %v328
  %v456 = vmax.f32 %v454, %v332
  %v457 = vmax.f32 %v455, %v338
  %v458 = vmax.f32 %v456, %v342
  %v459 = vmax.f32 %v457, %v348
  %v460 = vmax.f32 %v458, %v352
  %v461 = vmax.f32 %v459, %v358
  %v462 = vmax.f32 %v460, %v362
  %v463 = vmax.f32 %v461, %v368
  %v464 = vmax.f32 %v462, %v372
  %v465 = vmax.f32 %v463, %v378
  %v466 = vmax.f32 %v464, %v382
  %v467 = vmax.f32 %v465, %v388
  %v468 = vmax.f32 %v466, %v392
  %v469 = vmax.f32 %v467, %v398
  %v470 = vmax.f32 %v468, %v402
  %v471 = vmax.f32 %v469, %v470
  %v472 = vrot.slane %v471, 4
  %v473 = vmax.f32 %v471, %v472
  %v474 = vrot.slane %v473, 2
  %v475 = vmax.f32 %v473, %v474
  %v476 = vrot.slane %v475, 1
  %v477 = vmax.f32 %v475, %v476
  %v478 = vsub.f32 %v246, %v440
  %v479 = vsub.f32 %v248, %v477
  %v480 = vsub.f32 %v250, %v440
  %v481 = vsub.f32 %v252, %v477
  %v482 = vsub.f32 %v256, %v440
  %v483 = vsub.f32 %v258, %v477
  %v484 = vsub.f32 %v260, %v440
  %v485 = vsub.f32 %v262, %v477
  %v486 = vsub.f32 %v266, %v440
  %v487 = vsub.f32 %v268, %v477
  %v488 = vsub.f32 %v270, %v440
  %v489 = vsub.f32 %v272, %v477
  %v490 = vsub.f32 %v276, %v440
  %v491 = vsub.f32 %v278, %v477
  %v492 = vsub.f32 %v280, %v440
  %v493 = vsub.f32 %v282, %v477
  %v494 = vsub.f32 %v286, %v440
  %v495 = vsub.f32 %v288, %v477
  %v496 = vsub.f32 %v290, %v440
  %v497 = vsub.f32 %v292, %v477
  %v498 = vsub.f32 %v296, %v440
  %v499 = vsub.f32 %v298, %v477
  %v500 = vsub.f32 %v300, %v440
  %v501 = vsub.f32 %v302, %v477
  %v502 = vsub.f32 %v306, %v440
  %v503 = vsub.f32 %v308, %v477
  %v504 = vsub.f32 %v310, %v440
  %v505 = vsub.f32 %v312, %v477
  %v506 = vsub.f32 %v316, %v440
  %v507 = vsub.f32 %v318, %v477
  %v508 = vsub.f32 %v320, %v440
  %v509 = vsub.f32 %v322, %v477
  %v510 = vsub.f32 %v326, %v440
  %v511 = vsub.f32 %v328, %v477
  %v512 = vsub.f32 %v330, %v440
  %v513 = vsub.f32 %v332, %v477
  %v514 = vsub.f32 %v336, %v440
  %v515 = vsub.f32 %v338, %v477
  %v516 = vsub.f32 %v340, %v440
  %v517 = vsub.f32 %v342, %v477
  %v518 = vsub.f32 %v346, %v440
  %v519 = vsub.f32 %v348, %v477
  %v520 = vsub.f32 %v350, %v440
  %v521 = vsub.f32 %v352, %v477
  %v522 = vsub.f32 %v356, %v440
  %v523 = vsub.f32 %v358, %v477
  %v524 = vsub.f32 %v360, %v440
  %v525 = vsub.f32 %v362, %v477
  %v526 = vsub.f32 %v366, %v440
  %v527 = vsub.f32 %v368, %v477
  %v528 = vsub.f32 %v370, %v440
  %v529 = vsub.f32 %v372, %v477
  %v530 = vsub.f32 %v376, %v440
  %v531 = vsub.f32 %v378, %v477
  %v532 = vsub.f32 %v380, %v440
  %v533 = vsub.f32 %v382, %v477
  %v534 = vsub.f32 %v386, %v440
  %v535 = vsub.f32 %v388, %v477
  %v536 = vsub.f32 %v390, %v440
  %v537 = vsub.f32 %v392, %v477
  %v538 = vsub.f32 %v396, %v440
  %v539 = vsub.f32 %v398, %v477
  %v540 = vsub.f32 %v400, %v440
  %v541 = vsub.f32 %v402, %v477
  %v542 = vmul.f32 %v478, 1.442695
  %v543 = vpow.pop %v542
  %v544 = vmul.f32 %v479, 1.442695
  %v545 = vpow.pop %v544
  %v546 = vmul.f32 %v480, 1.442695
  %v547 = vpow.pop %v546
  %v548 = vmul.f32 %v481, 1.442695
  %v549 = vpow.pop %v548
  %v550 = vmul.f32 %v482, 1.442695
  %v551 = vpow.pop %v550
  %v552 = vmul.f32 %v483, 1.442695
  %v553 = vpow.pop %v552
  %v554 = vmul.f32 %v484, 1.442695
  %v555 = vpow.pop %v554
  %v556 = vmul.f32 %v485, 1.442695
  %v557 = vpow.pop %v556
  %v558 = vmul.f32 %v486, 1.442695
  %v559 = vpow.pop %v558
  %v560 = vmul.f32 %v487, 1.442695
  %v561 = vpow.pop %v560
  %v562 = vmul.f32 %v488, 1.442695
  %v563 = vpow.pop %v562
  %v564 = vmul.f32 %v489, 1.442695
  %v565 = vpow.pop %v564
  %v566 = vmul.f32 %v490, 1.442695
  %v567 = vpow.pop %v566
  %v568 = vmul.f32 %v491, 1.442695
  %v569 = vpow.pop %v568
  %v570 = vmul.f32 %v492, 1.442695
  %v571 = vpow.pop %v570
  %v572 = vmul.f32 %v493, 1.442695
  %v573 = vpow.pop %v572
  %v574 = vmul.f32 %v494, 1.442695
  %v575 = vpow.pop %v574
  %v576 = vmul.f32 %v495, 1.442695
  %v577 = vpow.pop %v576
  %v578 = vmul.f32 %v496, 1.442695
  %v579 = vpow.pop %v578
  %v580 = vmul.f32 %v497, 1.442695
  %v581 = vpow.pop %v580
  %v582 = vmul.f32 %v498, 1.442695
  %v583 = vpow.pop %v582
  %v584 = vmul.f32 %v499, 1.442695
  %v585 = vpow.pop %v584
  %v586 = vmul.f32 %v500, 1.442695
  %v587 = vpow.pop %v586
  %v588 = vmul.f32 %v501, 1.442695
  %v589 = vpow.pop %v588
  %v590 = vmul.f32 %v502, 1.442695
  %v591 = vpow.pop %v590
  %v592 = vmul.f32 %v503, 1.442695
  %v593 = vpow.pop %v592
  %v594 = vmul.f32 %v504, 1.442695
  %v595 = vpow.pop %v594
  %v596 = vmul.f32 %v505, 1.442695
  %v597 = vpow.pop %v596
  %v598 = vmul.f32 %v506, 1.442695
  %v599 = vpow.pop %v598
  %v600 = vmul.f32 %v507, 1.442695
  %v601 = vpow.pop %v600
  %v602 = vmul.f32 %v508, 1.442695
  %v603 = vpow.pop %v602
  %v604 = vmul.f32 %v509, 1.442695
  %v605 = vpow.pop %v604
  %v606 = vmul.f32 %v510, 1.442695
  %v607 = vpow.pop %v606
  %v608 = vmul.f32 %v511, 1.442695
  %v609 = vpow.pop %v608
  %v610 = vmul.f32 %v512, 1.442695
  %v611 = vpow.pop %v610
  %v612 = vmul.f32 %v513, 1.442695
  %v613 = vpow.pop %v612
  %v614 = vmul.f32 %v514, 1.442695
  %v615 = vpow.pop %v614
  %v616 = vmul.f32 %v515, 1.442695
  %v617 = vpow.pop %v616
  %v618 = vmul.f32 %v516, 1.442695
  %v619 = vpow.pop %v618
  %v620 = vmul.f32 %v517, 1.442695
  %v621 = vpow.pop %v620
  %v622 = vmul.f32 %v518, 1.442695
  %v623 = vpow.pop %v622
  %v624 = vmul.f32 %v519, 1.442695
  %v625 = vpow.pop %v624
  %v626 = vmul.f32 %v520, 1.442695
  %v627 = vpow.pop %v626
  %v628 = vmul.f32 %v521, 1.442695
  %v629 = vpow.pop %v628
  %v630 = vmul.f32 %v522, 1.442695
  %v631 = vpow.pop %v630
  %v632 = vmul.f32 %v523, 1.442695
  %v633 = vpow.pop %v632
  %v634 = vmul.f32 %v524, 1.442695
  %v635 = vpow.pop %v634
  %v636 = vmul.f32 %v525, 1.442695
  %v637 = vpow.pop %v636
  %v638 = vmul.f32 %v526, 1.442695
  %v639 = vpow.pop %v638
  %v640 = vmul.f32 %v527, 1.442695
  %v641 = vpow.pop %v640
  %v642 = vmul.f32 %v528, 1.442695
  %v643 = vpow.pop %v642
  %v644 = vmul.f32 %v529, 1.442695
  %v645 = vpow.pop %v644
  %v646 = vmul.f32 %v530, 1.442695
  %v647 = vpow.pop %v646
  %v648 = vmul.f32 %v531, 1.442695
  %v649 = vpow.pop %v648
  %v650 = vmul.f32 %v532, 1.442695
  %v651 = vpow.pop %v650
  %v652 = vmul.f32 %v533, 1.442695
  %v653 = vpow.pop %v652
  %v654 = vmul.f32 %v534, 1.442695
  %v655 = vpow.pop %v654
  %v656 = vmul.f32 %v535, 1.442695
  %v657 = vpow.pop %v656
  %v658 = vmul.f32 %v536, 1.442695
  %v659 = vpow.pop %v658
  %v660 = vmul.f32 %v537, 1.442695
  %v661 = vpow.pop %v660
  %v662 = vmul.f32 %v538, 1.442695
  %v663 = vpow.pop %v662
  %v664 = vmul.f32 %v539, 1.442695
  %v665 = vpow.pop %v664
  %v666 = vmul.f32 %v540, 1.442695
  %v667 = vpow.pop %v666
  %v668 = vmul.f32 %v541, 1.442695
  %v669 = vpow.pop %v668
  %v670 = vadd.f32 %v543, %v547
  %v671 = vadd.f32 %v670, %v551
  %v672 = vadd.f32 %v671, %v555
  %v673 = vadd.f32 %v672, %v559
  %v674 = vadd.f32 %v673, %v563
  %v675 = vadd.f32 %v674, %v567
  %v676 = vadd.f32 %v675, %v571
  %v677 = vadd.f32 %v676, %v575
  %v678 = vadd.f32 %v677, %v579
  %v679 = vadd.f32 %v678, %v583
  %v680 = vadd.f32 %v679, %v587
  %v681 = vadd.f32 %v680, %v591
  %v682 = vadd.f32 %v681, %v595
  %v683 = vadd.f32 %v682, %v599
  %v684 = vadd.f32 %v683, %v603
  %v685 = vadd.f32 %v684, %v607
  %v686 = vadd.f32 %v685, %v611
  %v687 = vadd.f32 %v686, %v615
  %v688 = vadd.f32 %v687, %v619
  %v689 = vadd.f32 %v688, %v623
  %v690 = vadd.f32 %v689, %v627
  %v691 = vadd.f32 %v690, %v631
  %v692 = vadd.f32 %v691, %v635
  %v693 = vadd.f32 %v692, %v639
  %v694 = vadd.f32 %v693, %v643
  %v695 = vadd.f32 %v694, %v647
  %v696 = vadd.f32 %v695, %v651
  %v697 = vadd.f32 %v696, %v655
  %v698 = vadd.f32 %v697, %v659
  %v699 = vadd.f32 %v698, %v663
  %v700 = vadd.f32 %v699, %v667
  %v701 = vrot.slane %v700, 4
  %v702 = vadd.f32 %v700, %v701
  %v703 = vrot.slane %v702, 2
  %v704 = vadd.f32 %v702, %v703
  %v705 = vrot.slane %v704, 1
  %v706 = vadd.f32 %v704, %v705
  %v707 = vadd.f32 %v545, %v549
  %v708 = vadd.f32 %v707, %v553
  %v709 = vadd.f32 %v708, %v557
  %v710 = vadd.f32 %v709, %v561
  %v711 = vadd.f32 %v710, %v565
  %v712 = vadd.f32 %v711, %v569
  %v713 = vadd.f32 %v712, %v573
  %v714 = vadd.f32 %v713, %v577
  %v715 = vadd.f32 %v714, %v581
  %v716 = vadd.f32 %v715, %v585
  %v717 = vadd.f32 %v716, %v589
  %v718 = vadd.f32 %v717, %v593
  %v719 = vadd.f32 %v718, %v597
  %v720 = vadd.f32 %v719, %v601
  %v721 = vadd.f32 %v720, %v605
  %v722 = vadd.f32 %v721, %v609
  %v723 = vadd.f32 %v722, %v613
  %v724 = vadd.f32 %v723, %v617
  %v725 = vadd.f32 %v724, %v621
  %v726 = vadd.f32 %v725, %v625
  %v727 = vadd.f32 %v726, %v629
  %v728 = vadd.f32 %v727, %v633
  %v729 = vadd.f32 %v728, %v637
  %v730 = vadd.f32 %v729, %v641
  %v731 = vadd.f32 %v730, %v645
  %v732 = vadd.f32 %v731, %v649
  %v733 = vadd.f32 %v732, %v653
  %v734 = vadd.f32 %v733, %v657
  %v735 = vadd.f32 %v734, %v661
  %v736 = vadd.f32 %v735, %v665
  %v737 = vadd.f32 %v736, %v669
  %v738 = vrot.slane %v737, 4
  %v739 = vadd.f32 %v737, %v738
  %v740 = vrot.slane %v739, 2
  %v741 = vadd.f32 %v739, %v740
  %v742 = vrot.slane %v741, 1
  %v743 = vadd.f32 %v741, %v742
  %v744 = vpack.c.bf16 %v105, %v101
  %v745 = vpack.c.bf16 %v107, %v103
  %v746 = vpack.c.bf16 %v547, %v543
  %v747 = vpack.c.bf16 %v549, %v545
  %v748 = vpack.c.bf16 %v555, %v551
  %v749 = vpack.c.bf16 %v557, %v553
  %v750 = vpack.c.bf16 %v563, %v559
  %v751 = vpack.c.bf16 %v565, %v561
  %v752 = vpack.c.bf16 %v571, %v567
  %v753 = vpack.c.bf16 %v573, %v569
  %v754 = vpack.c.bf16 %v579, %v575
  %v755 = vpack.c.bf16 %v581, %v577
  %v756 = vpack.c.bf16 %v587, %v583
  %v757 = vpack.c.bf16 %v589, %v585
  %v758 = vpack.c.bf16 %v595, %v591
  %v759 = vpack.c.bf16 %v597, %v593
  %v760 = vpack.c.bf16 %v603, %v599
  %v761 = vpack.c.bf16 %v605, %v601
  %v762 = vpack.c.bf16 %v611, %v607
  %v763 = vpack.c.bf16 %v613, %v609
  %v764 = vpack.c.bf16 %v619, %v615
  %v765 = vpack.c.bf16 %v621, %v617
  %v766 = vpack.c.bf16 %v627, %v623
  %v767 = vpack.c.bf16 %v629, %v625
  %v768 = vpack.c.bf16 %v635, %v631
  %v769 = vpack.c.bf16 %v637, %v633
  %v770 = vpack.c.bf16 %v643, %v639
  %v771 = vpack.c.bf16 %v645, %v641
  %v772 = vpack.c.bf16 %v651, %v647
  %v773 = vpack.c.bf16 %v653, %v649
  %v774 = vpack.c.bf16 %v659, %v655
  %v775 = vpack.c.bf16 %v661, %v657
  %v776 = vpack.c.bf16 %v667, %v663
  %v777 = vpack.c.bf16 %v669, %v665
  %778 = vmatprep.subr.bf16.mxu0 %v747
  %779 = vmatpush1.bf16.msra.mxu0 %v746
  %780 = vmatprep.subr.bf16.mxu0 %v749
  %781 = vmatpush1.bf16.msra.mxu0 %v748
  %782 = vmatprep.subr.bf16.mxu0 %v751
  %783 = vmatpush1.bf16.msra.mxu0 %v750
  %784 = vmatprep.subr.bf16.mxu0 %v753
  %785 = vmatpush1.bf16.msra.mxu0 %v752
  %786 = vmatprep.subr.bf16.mxu0 %v755
  %787 = vmatpush1.bf16.msra.mxu0 %v754
  %788 = vmatprep.subr.bf16.mxu0 %v757
  %789 = vmatpush1.bf16.msra.mxu0 %v756
  %790 = vmatprep.subr.bf16.mxu0 %v759
  %791 = vmatpush1.bf16.msra.mxu0 %v758
  %792 = vmatprep.subr.bf16.mxu0 %v761
  %793 = vmatpush1.bf16.msra.mxu0 %v760
  %794 = vmatprep.subr.bf16.mxu0 %v763
  %795 = vmatpush1.bf16.msra.mxu0 %v762
  %796 = vmatprep.subr.bf16.mxu0 %v765
  %797 = vmatpush1.bf16.msra.mxu0 %v764
  %798 = vmatprep.subr.bf16.mxu0 %v767
  %799 = vmatpush1.bf16.msra.mxu0 %v766
  %800 = vmatprep.subr.bf16.mxu0 %v769
  %801 = vmatpush1.bf16.msra.mxu0 %v768
  %802 = vmatprep.subr.bf16.mxu0 %v771
  %803 = vmatpush1.bf16.msra.mxu0 %v770
  %804 = vmatprep.subr.bf16.mxu0 %v773
  %805 = vmatpush1.bf16.msra.mxu0 %v772
  %806 = vmatprep.subr.bf16.mxu0 %v775
  %807 = vmatpush1.bf16.msra.mxu0 %v774
  %808 = vmatprep.subr.bf16.mxu0 %v777
  %809 = vmatpush1.bf16.msra.mxu0 %v776
  %810 = vmatprep.mubr.bf16.mxu0 %v745
  %811 = vmatmul.mubr.bf16.gmra.mrb[0].mxu0 %v744
  %v812 = vpop.f32.mrb[0].mxu0
  %v813 = vadd.f32 0.0, %v812
  %v814 = vpop.f32.mrb[0].mxu0
  %v815 = vadd.f32 0.0, %v814
  %v816 = vpop.f32.mrb[0].mxu0
  %v817 = vadd.f32 0.0, %v816
  %v818 = vpop.f32.mrb[0].mxu0
  %v819 = vadd.f32 0.0, %v818
  %820 = vdwg.mxu0
  %v821 = vrcp.pop %v706
  %v822 = vrcp.pop %v743
  %v823 = vmul.f32 %v813, %v821
  %v824 = vmul.f32 %v815, %v822
  %v825 = vmul.f32 %v817, %v821
  %v826 = vmul.f32 %v819, %v822
  %v827 = vadd.f32 %v823, %v23
  %v828 = vadd.f32 %v824, %v24
  %v829 = vadd.f32 %v825, %v25
  %v830 = vadd.f32 %v826, %v26
  %831 = vst [vmem:[%s3] sm:$0xff] %v827
  %832 = vst [vmem:[%s3 + $0x8] sm:$0xff] %v828
  %833 = vst [vmem:[%s3 + $0x10] sm:$0xff] %v829
  %834 = vst [vmem:[%s3 + $0x18] sm:$0xff] %v830
  %s835 = scalar_lea.vmem %s0, 32
  %v836 = vld [vmem:[%s835] sm:$0xff]
  %v837 = vld [vmem:[%s835 + $0x8] sm:$0xff]
  %v838 = vld [vmem:[%s835 + $0x10] sm:$0xff]
  %v839 = vld [vmem:[%s835 + $0x18] sm:$0xff]
  %v840 = vpack.c.bf16 %v838, %v836
  %v841 = vpack.c.bf16 %v839, %v837
  %842 = vmatprep.subr.bf16.mxu0 %v841
  %843 = vmatpush1.bf16.msra.mxu0 %v840
  %844 = vmatprep.subr.bf16.mxu0 0
  %845 = vmatpush1.bf16.msra.mxu0 0
  %846 = vmatprep.subr.bf16.mxu0 0
  %847 = vmatpush1.bf16.msra.mxu0 0
  %848 = vmatprep.subr.bf16.mxu0 0
  %849 = vmatpush1.bf16.msra.mxu0 0
  %850 = vmatprep.subr.bf16.mxu0 0
  %851 = vmatpush1.bf16.msra.mxu0 0
  %852 = vmatprep.subr.bf16.mxu0 0
  %853 = vmatpush1.bf16.msra.mxu0 0
  %854 = vmatprep.subr.bf16.mxu0 0
  %855 = vmatpush1.bf16.msra.mxu0 0
  %856 = vmatprep.subr.bf16.mxu0 0
  %857 = vmatpush1.bf16.msra.mxu0 0
  %858 = vmatprep.subr.bf16.mxu0 0
  %859 = vmatpush1.bf16.msra.mxu0 0
  %860 = vmatprep.subr.bf16.mxu0 0
  %861 = vmatpush1.bf16.msra.mxu0 0
  %862 = vmatprep.subr.bf16.mxu0 0
  %863 = vmatpush1.bf16.msra.mxu0 0
  %864 = vmatprep.subr.bf16.mxu0 0
  %865 = vmatpush1.bf16.msra.mxu0 0
  %866 = vmatprep.subr.bf16.mxu0 0
  %867 = vmatpush1.bf16.msra.mxu0 0
  %868 = vmatprep.subr.bf16.mxu0 0
  %869 = vmatpush1.bf16.msra.mxu0 0
  %870 = vmatprep.subr.bf16.mxu0 0
  %871 = vmatpush1.bf16.msra.mxu0 0
  %872 = vmatprep.subr.bf16.mxu0 0
  %873 = vmatpush1.bf16.msra.mxu0 0
  %874 = vmatprep.mubr.bf16.mxu0 0
  %875 = vmatmul.mubr.bf16.gmra.mrb[0].mxu0 %v61
  %v876 = vpop.f32.mrb[0].mxu0
  %v877 = vadd.f32 %v32, %v876
  %v878 = vpop.f32.mrb[0].mxu0
  %v879 = vadd.f32 %v32, %v878
  %v880 = vpop.f32.mrb[0].mxu0
  %v881 = vadd.f32 %v37, %v880
  %v882 = vpop.f32.mrb[0].mxu0
  %v883 = vadd.f32 %v37, %v882
  %884 = vmatprep.mubr.bf16.mxu0 0
  %885 = vmatmul.mubr.bf16.gmra.mrb[0].mxu0 %v64
  %v886 = vpop.f32.mrb[0].mxu0
  %v887 = vadd.f32 %v42, %v886
  %v888 = vpop.f32.mrb[0].mxu0
  %v889 = vadd.f32 %v42, %v888
  %v890 = vpop.f32.mrb[0].mxu0
  %v891 = vadd.f32 %v47, %v890
  %v892 = vpop.f32.mrb[0].mxu0
  %v893 = vadd.f32 %v47, %v892
  %894 = vdwg.mxu0
  %v895 = vpack.c.bf16 %v887, %v887
  %v896 = vpack.c.bf16 %v889, %v889
  %v897 = vpack.c.bf16 %v891, %v891
  %v898 = vpack.c.bf16 %v893, %v893
  %899 = vxpose.xlu0.c.b16.start [1/8] %v895, 128
  %900 = vxpose.xlu0.c.b16.cont [2/8] 0, 128
  %901 = vxpose.xlu0.c.b16.cont [3/8] 0, 128
  %902 = vxpose.xlu0.c.b16.cont [4/8] 0, 128
  %903 = vxpose.xlu0.c.b16.cont [5/8] 0, 128
  %904 = vxpose.xlu0.c.b16.cont [6/8] 0, 128
  %905 = vxpose.xlu0.c.b16.cont [7/8] 0, 128
  %906 = vxpose.xlu0.c.b16.end [8/8] 0, 128
  %v907 = vpop.trf.xlu0
  %v908 = vpop.trf.xlu0
  %v909 = vpop.trf.xlu0
  %v910 = vpop.trf.xlu0
  %v911 = vpop.trf.xlu0
  %v912 = vpop.trf.xlu0
  %v913 = vpop.trf.xlu0
  %v914 = vpop.trf.xlu0
  %915 = vxpose.xlu0.c.b16.start [1/8] %v896, 128
  %916 = vxpose.xlu0.c.b16.cont [2/8] 0, 128
  %917 = vxpose.xlu0.c.b16.cont [3/8] 0, 128
  %918 = vxpose.xlu0.c.b16.cont [4/8] 0, 128
  %919 = vxpose.xlu0.c.b16.cont [5/8] 0, 128
  %920 = vxpose.xlu0.c.b16.cont [6/8] 0, 128
  %921 = vxpose.xlu0.c.b16.cont [7/8] 0, 128
  %922 = vxpose.xlu0.c.b16.end [8/8] 0, 128
  %v923 = vpop.trf.xlu0
  %v924 = vpop.trf.xlu0
  %v925 = vpop.trf.xlu0
  %v926 = vpop.trf.xlu0
  %v927 = vpop.trf.xlu0
  %v928 = vpop.trf.xlu0
  %v929 = vpop.trf.xlu0
  %v930 = vpop.trf.xlu0
  %v932 = vsel %vm155, %v907, 0
  %v935 = vsel %vm155, %v908, 0
  %v938 = vsel %vm155, %v909, 0
  %v941 = vsel %vm155, %v910, 0
  %v944 = vsel %vm155, %v911, 0
  %v947 = vsel %vm155, %v912, 0
  %v950 = vsel %vm155, %v913, 0
  %v953 = vsel %vm155, %v914, 0
  %v956 = vsel %vm155, %v923, 0
  %v959 = vsel %vm155, %v924, 0
  %v962 = vsel %vm155, %v925, 0
  %v965 = vsel %vm155, %v926, 0
  %v968 = vsel %vm155, %v927, 0
  %v971 = vsel %vm155, %v928, 0
  %v974 = vsel %vm155, %v929, 0
  %v977 = vsel %vm155, %v930, 0
  %v980 = vsel %vm204, %v897, 0
  %v983 = vsel %vm204, %v898, 0
  %985 = vmatprep.subr.bf16.mxu0 %v983
  %986 = vmatpush1.bf16.msra.mxu0 %v980
  %987 = vmatprep.subr.bf16.mxu0 0
  %988 = vmatpush1.bf16.msra.mxu0 0
  %989 = vmatprep.subr.bf16.mxu0 0
  %990 = vmatpush1.bf16.msra.mxu0 0
  %991 = vmatprep.subr.bf16.mxu0 0
  %992 = vmatpush1.bf16.msra.mxu0 0
  %993 = vmatprep.subr.bf16.mxu0 0
  %994 = vmatpush1.bf16.msra.mxu0 0
  %995 = vmatprep.subr.bf16.mxu0 0
  %996 = vmatpush1.bf16.msra.mxu0 0
  %997 = vmatprep.subr.bf16.mxu0 0
  %998 = vmatpush1.bf16.msra.mxu0 0
  %999 = vmatprep.subr.bf16.mxu0 0
  %1000 = vmatpush1.bf16.msra.mxu0 0
  %1001 = vmatprep.subr.bf16.mxu0 0
  %1002 = vmatpush1.bf16.msra.mxu0 0
  %1003 = vmatprep.subr.bf16.mxu0 0
  %1004 = vmatpush1.bf16.msra.mxu0 0
  %1005 = vmatprep.subr.bf16.mxu0 0
  %1006 = vmatpush1.bf16.msra.mxu0 0
  %1007 = vmatprep.subr.bf16.mxu0 0
  %1008 = vmatpush1.bf16.msra.mxu0 0
  %1009 = vmatprep.subr.bf16.mxu0 0
  %1010 = vmatpush1.bf16.msra.mxu0 0
  %1011 = vmatprep.subr.bf16.mxu0 0
  %1012 = vmatpush1.bf16.msra.mxu0 0
  %1013 = vmatprep.subr.bf16.mxu0 0
  %1014 = vmatpush1.bf16.msra.mxu0 0
  %1015 = vmatprep.subr.bf16.mxu0 0
  %1016 = vmatpush1.bf16.msra.mxu0 0
  %1017 = vmatprep.mubr.bf16.mxu0 0
  %1018 = vmatmul.mubr.bf16.gmra.mrb[0].mxu0 %v932
  %v1019 = vpop.f32.mrb[0].mxu0
  %v1020 = vadd.f32 0.0, %v1019
  %v1021 = vpop.f32.mrb[0].mxu0
  %v1022 = vadd.f32 0.0, %v1021
  %v1023 = vpop.f32.mrb[0].mxu0
  %v1024 = vadd.f32 0.0, %v1023
  %v1025 = vpop.f32.mrb[0].mxu0
  %v1026 = vadd.f32 0.0, %v1025
  %1027 = vmatprep.mubr.bf16.mxu0 0
  %1028 = vmatmul.mubr.bf16.gmra.mrb[0].mxu0 %v935
  %v1029 = vpop.f32.mrb[0].mxu0
  %v1030 = vadd.f32 0.0, %v1029
  %v1031 = vpop.f32.mrb[0].mxu0
  %v1032 = vadd.f32 0.0, %v1031
  %v1033 = vpop.f32.mrb[0].mxu0
  %v1034 = vadd.f32 0.0, %v1033
  %v1035 = vpop.f32.mrb[0].mxu0
  %v1036 = vadd.f32 0.0, %v1035
  %1037 = vmatprep.mubr.bf16.mxu0 0
  %1038 = vmatmul.mubr.bf16.gmra.mrb[0].mxu0 %v938
  %v1039 = vpop.f32.mrb[0].mxu0
  %v1040 = vadd.f32 0.0, %v1039
  %v1041 = vpop.f32.mrb[0].mxu0
  %v1042 = vadd.f32 0.0, %v1041
  %v1043 = vpop.f32.mrb[0].mxu0
  %v1044 = vadd.f32 0.0, %v1043
  %v1045 = vpop.f32.mrb[0].mxu0
  %v1046 = vadd.f32 0.0, %v1045
  %1047 = vmatprep.mubr.bf16.mxu0 0
  %1048 = vmatmul.mubr.bf16.gmra.mrb[0].mxu0 %v941
  %v1049 = vpop.f32.mrb[0].mxu0
  %v1050 = vadd.f32 0.0, %v1049
  %v1051 = vpop.f32.mrb[0].mxu0
  %v1052 = vadd.f32 0.0, %v1051
  %v1053 = vpop.f32.mrb[0].mxu0
  %v1054 = vadd.f32 0.0, %v1053
  %v1055 = vpop.f32.mrb[0].mxu0
  %v1056 = vadd.f32 0.0, %v1055
  %1057 = vmatprep.mubr.bf16.mxu0 0
  %1058 = vmatmul.mubr.bf16.gmra.mrb[0].mxu0 %v944
  %v1059 = vpop.f32.mrb[0].mxu0
  %v1060 = vadd.f32 0.0, %v1059
  %v1061 = vpop.f32.mrb[0].mxu0
  %v1062 = vadd.f32 0.0, %v1061
  %v1063 = vpop.f32.mrb[0].mxu0
  %v1064 = vadd.f32 0.0, %v1063
  %v1065 = vpop.f32.mrb[0].mxu0
  %v1066 = vadd.f32 0.0, %v1065
  %1067 = vmatprep.mubr.bf16.mxu0 0
  %1068 = vmatmul.mubr.bf16.gmra.mrb[0].mxu0 %v947
  %v1069 = vpop.f32.mrb[0].mxu0
  %v1070 = vadd.f32 0.0, %v1069
  %v1071 = vpop.f32.mrb[0].mxu0
  %v1072 = vadd.f32 0.0, %v1071
  %v1073 = vpop.f32.mrb[0].mxu0
  %v1074 = vadd.f32 0.0, %v1073
  %v1075 = vpop.f32.mrb[0].mxu0
  %v1076 = vadd.f32 0.0, %v1075
  %1077 = vmatprep.mubr.bf16.mxu0 0
  %1078 = vmatmul.mubr.bf16.gmra.mrb[0].mxu0 %v950
  %v1079 = vpop.f32.mrb[0].mxu0
  %v1080 = vadd.f32 0.0, %v1079
  %v1081 = vpop.f32.mrb[0].mxu0
  %v1082 = vadd.f32 0.0, %v1081
  %v1083 = vpop.f32.mrb[0].mxu0
  %v1084 = vadd.f32 0.0, %v1083
  %v1085 = vpop.f32.mrb[0].mxu0
  %v1086 = vadd.f32 0.0, %v1085
  %1087 = vmatprep.mubr.bf16.mxu0 0
  %1088 = vmatmul.mubr.bf16.gmra.mrb[0].mxu0 %v953
  %v1089 = vpop.f32.mrb[0].mxu0
  %v1090 = vadd.f32 0.0, %v1089
  %v1091 = vpop.f32.mrb[0].mxu0
  %v1092 = vadd.f32 0.0, %v1091
  %v1093 = vpop.f32.mrb[0].mxu0
  %v1094 = vadd.f32 0.0, %v1093
  %v1095 = vpop.f32.mrb[0].mxu0
  %v1096 = vadd.f32 0.0, %v1095
  %1097 = vmatprep.mubr.bf16.mxu0 0
  %1098 = vmatmul.mubr.bf16.gmra.mrb[0].mxu0 %v956
  %v1099 = vpop.f32.mrb[0].mxu0
  %v1100 = vadd.f32 0.0, %v1099
  %v1101 = vpop.f32.mrb[0].mxu0
  %v1102 = vadd.f32 0.0, %v1101
  %v1103 = vpop.f32.mrb[0].mxu0
  %v1104 = vadd.f32 0.0, %v1103
  %v1105 = vpop.f32.mrb[0].mxu0
  %v1106 = vadd.f32 0.0, %v1105
  %1107 = vmatprep.mubr.bf16.mxu0 0
  %1108 = vmatmul.mubr.bf16.gmra.mrb[0].mxu0 %v959
  %v1109 = vpop.f32.mrb[0].mxu0
  %v1110 = vadd.f32 0.0, %v1109
  %v1111 = vpop.f32.mrb[0].mxu0
  %v1112 = vadd.f32 0.0, %v1111
  %v1113 = vpop.f32.mrb[0].mxu0
  %v1114 = vadd.f32 0.0, %v1113
  %v1115 = vpop.f32.mrb[0].mxu0
  %v1116 = vadd.f32 0.0, %v1115
  %1117 = vmatprep.mubr.bf16.mxu0 0
  %1118 = vmatmul.mubr.bf16.gmra.mrb[0].mxu0 %v962
  %v1119 = vpop.f32.mrb[0].mxu0
  %v1120 = vadd.f32 0.0, %v1119
  %v1121 = vpop.f32.mrb[0].mxu0
  %v1122 = vadd.f32 0.0, %v1121
  %v1123 = vpop.f32.mrb[0].mxu0
  %v1124 = vadd.f32 0.0, %v1123
  %v1125 = vpop.f32.mrb[0].mxu0
  %v1126 = vadd.f32 0.0, %v1125
  %1127 = vmatprep.mubr.bf16.mxu0 0
  %1128 = vmatmul.mubr.bf16.gmra.mrb[0].mxu0 %v965
  %v1129 = vpop.f32.mrb[0].mxu0
  %v1130 = vadd.f32 0.0, %v1129
  %v1131 = vpop.f32.mrb[0].mxu0
  %v1132 = vadd.f32 0.0, %v1131
  %v1133 = vpop.f32.mrb[0].mxu0
  %v1134 = vadd.f32 0.0, %v1133
  %v1135 = vpop.f32.mrb[0].mxu0
  %v1136 = vadd.f32 0.0, %v1135
  %1137 = vmatprep.mubr.bf16.mxu0 0
  %1138 = vmatmul.mubr.bf16.gmra.mrb[0].mxu0 %v968
  %v1139 = vpop.f32.mrb[0].mxu0
  %v1140 = vadd.f32 0.0, %v1139
  %v1141 = vpop.f32.mrb[0].mxu0
  %v1142 = vadd.f32 0.0, %v1141
  %v1143 = vpop.f32.mrb[0].mxu0
  %v1144 = vadd.f32 0.0, %v1143
  %v1145 = vpop.f32.mrb[0].mxu0
  %v1146 = vadd.f32 0.0, %v1145
  %1147 = vmatprep.mubr.bf16.mxu0 0
  %1148 = vmatmul.mubr.bf16.gmra.mrb[0].mxu0 %v971
  %v1149 = vpop.f32.mrb[0].mxu0
  %v1150 = vadd.f32 0.0, %v1149
  %v1151 = vpop.f32.mrb[0].mxu0
  %v1152 = vadd.f32 0.0, %v1151
  %v1153 = vpop.f32.mrb[0].mxu0
  %v1154 = vadd.f32 0.0, %v1153
  %v1155 = vpop.f32.mrb[0].mxu0
  %v1156 = vadd.f32 0.0, %v1155
  %1157 = vmatprep.mubr.bf16.mxu0 0
  %1158 = vmatmul.mubr.bf16.gmra.mrb[0].mxu0 %v974
  %v1159 = vpop.f32.mrb[0].mxu0
  %v1160 = vadd.f32 0.0, %v1159
  %v1161 = vpop.f32.mrb[0].mxu0
  %v1162 = vadd.f32 0.0, %v1161
  %v1163 = vpop.f32.mrb[0].mxu0
  %v1164 = vadd.f32 0.0, %v1163
  %v1165 = vpop.f32.mrb[0].mxu0
  %v1166 = vadd.f32 0.0, %v1165
  %1167 = vmatprep.mubr.bf16.mxu0 0
  %1168 = vmatmul.mubr.bf16.gmra.mrb[0].mxu0 %v977
  %v1169 = vpop.f32.mrb[0].mxu0
  %v1170 = vadd.f32 0.0, %v1169
  %v1171 = vpop.f32.mrb[0].mxu0
  %v1172 = vadd.f32 0.0, %v1171
  %v1173 = vpop.f32.mrb[0].mxu0
  %v1174 = vadd.f32 0.0, %v1173
  %v1175 = vpop.f32.mrb[0].mxu0
  %v1176 = vadd.f32 0.0, %v1175
  %1177 = vdwg.mxu0
  %v1178 = vmax.f32 %v1020, %v1030
  %v1179 = vmax.f32 %v1024, %v1034
  %v1180 = vmax.f32 %v1178, %v1040
  %v1181 = vmax.f32 %v1179, %v1044
  %v1182 = vmax.f32 %v1180, %v1050
  %v1183 = vmax.f32 %v1181, %v1054
  %v1184 = vmax.f32 %v1182, %v1060
  %v1185 = vmax.f32 %v1183, %v1064
  %v1186 = vmax.f32 %v1184, %v1070
  %v1187 = vmax.f32 %v1185, %v1074
  %v1188 = vmax.f32 %v1186, %v1080
  %v1189 = vmax.f32 %v1187, %v1084
  %v1190 = vmax.f32 %v1188, %v1090
  %v1191 = vmax.f32 %v1189, %v1094
  %v1192 = vmax.f32 %v1190, %v1100
  %v1193 = vmax.f32 %v1191, %v1104
  %v1194 = vmax.f32 %v1192, %v1110
  %v1195 = vmax.f32 %v1193, %v1114
  %v1196 = vmax.f32 %v1194, %v1120
  %v1197 = vmax.f32 %v1195, %v1124
  %v1198 = vmax.f32 %v1196, %v1130
  %v1199 = vmax.f32 %v1197, %v1134
  %v1200 = vmax.f32 %v1198, %v1140
  %v1201 = vmax.f32 %v1199, %v1144
  %v1202 = vmax.f32 %v1200, %v1150
  %v1203 = vmax.f32 %v1201, %v1154
  %v1204 = vmax.f32 %v1202, %v1160
  %v1205 = vmax.f32 %v1203, %v1164
  %v1206 = vmax.f32 %v1204, %v1170
  %v1207 = vmax.f32 %v1205, %v1174
  %v1208 = vmax.f32 %v1206, %v1207
  %v1209 = vrot.slane %v1208, 4
  %v1210 = vmax.f32 %v1208, %v1209
  %v1211 = vrot.slane %v1210, 2
  %v1212 = vmax.f32 %v1210, %v1211
  %v1213 = vrot.slane %v1212, 1
  %v1214 = vmax.f32 %v1212, %v1213
  %v1215 = vmax.f32 %v1022, %v1032
  %v1216 = vmax.f32 %v1026, %v1036
  %v1217 = vmax.f32 %v1215, %v1042
  %v1218 = vmax.f32 %v1216, %v1046
  %v1219 = vmax.f32 %v1217, %v1052
  %v1220 = vmax.f32 %v1218, %v1056
  %v1221 = vmax.f32 %v1219, %v1062
  %v1222 = vmax.f32 %v1220, %v1066
  %v1223 = vmax.f32 %v1221, %v1072
  %v1224 = vmax.f32 %v1222, %v1076
  %v1225 = vmax.f32 %v1223, %v1082
  %v1226 = vmax.f32 %v1224, %v1086
  %v1227 = vmax.f32 %v1225, %v1092
  %v1228 = vmax.f32 %v1226, %v1096
  %v1229 = vmax.f32 %v1227, %v1102
  %v1230 = vmax.f32 %v1228, %v1106
  %v1231 = vmax.f32 %v1229, %v1112
  %v1232 = vmax.f32 %v1230, %v1116
  %v1233 = vmax.f32 %v1231, %v1122
  %v1234 = vmax.f32 %v1232, %v1126
  %v1235 = vmax.f32 %v1233, %v1132
  %v1236 = vmax.f32 %v1234, %v1136
  %v1237 = vmax.f32 %v1235, %v1142
  %v1238 = vmax.f32 %v1236, %v1146
  %v1239 = vmax.f32 %v1237, %v1152
  %v1240 = vmax.f32 %v1238, %v1156
  %v1241 = vmax.f32 %v1239, %v1162
  %v1242 = vmax.f32 %v1240, %v1166
  %v1243 = vmax.f32 %v1241, %v1172
  %v1244 = vmax.f32 %v1242, %v1176
  %v1245 = vmax.f32 %v1243, %v1244
  %v1246 = vrot.slane %v1245, 4
  %v1247 = vmax.f32 %v1245, %v1246
  %v1248 = vrot.slane %v1247, 2
  %v1249 = vmax.f32 %v1247, %v1248
  %v1250 = vrot.slane %v1249, 1
  %v1251 = vmax.f32 %v1249, %v1250
  %v1252 = vsub.f32 %v1020, %v1214
  %v1253 = vsub.f32 %v1022, %v1251
  %v1254 = vsub.f32 %v1024, %v1214
  %v1255 = vsub.f32 %v1026, %v1251
  %v1256 = vsub.f32 %v1030, %v1214
  %v1257 = vsub.f32 %v1032, %v1251
  %v1258 = vsub.f32 %v1034, %v1214
  %v1259 = vsub.f32 %v1036, %v1251
  %v1260 = vsub.f32 %v1040, %v1214
  %v1261 = vsub.f32 %v1042, %v1251
  %v1262 = vsub.f32 %v1044, %v1214
  %v1263 = vsub.f32 %v1046, %v1251
  %v1264 = vsub.f32 %v1050, %v1214
  %v1265 = vsub.f32 %v1052, %v1251
  %v1266 = vsub.f32 %v1054, %v1214
  %v1267 = vsub.f32 %v1056, %v1251
  %v1268 = vsub.f32 %v1060, %v1214
  %v1269 = vsub.f32 %v1062, %v1251
  %v1270 = vsub.f32 %v1064, %v1214
  %v1271 = vsub.f32 %v1066, %v1251
  %v1272 = vsub.f32 %v1070, %v1214
  %v1273 = vsub.f32 %v1072, %v1251
  %v1274 = vsub.f32 %v1074, %v1214
  %v1275 = vsub.f32 %v1076, %v1251
  %v1276 = vsub.f32 %v1080, %v1214
  %v1277 = vsub.f32 %v1082, %v1251
  %v1278 = vsub.f32 %v1084, %v1214
  %v1279 = vsub.f32 %v1086, %v1251
  %v1280 = vsub.f32 %v1090, %v1214
  %v1281 = vsub.f32 %v1092, %v1251
  %v1282 = vsub.f32 %v1094, %v1214
  %v1283 = vsub.f32 %v1096, %v1251
  %v1284 = vsub.f32 %v1100, %v1214
  %v1285 = vsub.f32 %v1102, %v1251
  %v1286 = vsub.f32 %v1104, %v1214
  %v1287 = vsub.f32 %v1106, %v1251
  %v1288 = vsub.f32 %v1110, %v1214
  %v1289 = vsub.f32 %v1112, %v1251
  %v1290 = vsub.f32 %v1114, %v1214
  %v1291 = vsub.f32 %v1116, %v1251
  %v1292 = vsub.f32 %v1120, %v1214
  %v1293 = vsub.f32 %v1122, %v1251
  %v1294 = vsub.f32 %v1124, %v1214
  %v1295 = vsub.f32 %v1126, %v1251
  %v1296 = vsub.f32 %v1130, %v1214
  %v1297 = vsub.f32 %v1132, %v1251
  %v1298 = vsub.f32 %v1134, %v1214
  %v1299 = vsub.f32 %v1136, %v1251
  %v1300 = vsub.f32 %v1140, %v1214
  %v1301 = vsub.f32 %v1142, %v1251
  %v1302 = vsub.f32 %v1144, %v1214
  %v1303 = vsub.f32 %v1146, %v1251
  %v1304 = vsub.f32 %v1150, %v1214
  %v1305 = vsub.f32 %v1152, %v1251
  %v1306 = vsub.f32 %v1154, %v1214
  %v1307 = vsub.f32 %v1156, %v1251
  %v1308 = vsub.f32 %v1160, %v1214
  %v1309 = vsub.f32 %v1162, %v1251
  %v1310 = vsub.f32 %v1164, %v1214
  %v1311 = vsub.f32 %v1166, %v1251
  %v1312 = vsub.f32 %v1170, %v1214
  %v1313 = vsub.f32 %v1172, %v1251
  %v1314 = vsub.f32 %v1174, %v1214
  %v1315 = vsub.f32 %v1176, %v1251
  %v1316 = vmul.f32 %v1252, 1.442695
  %v1317 = vpow.pop %v1316
  %v1318 = vmul.f32 %v1253, 1.442695
  %v1319 = vpow.pop %v1318
  %v1320 = vmul.f32 %v1254, 1.442695
  %v1321 = vpow.pop %v1320
  %v1322 = vmul.f32 %v1255, 1.442695
  %v1323 = vpow.pop %v1322
  %v1324 = vmul.f32 %v1256, 1.442695
  %v1325 = vpow.pop %v1324
  %v1326 = vmul.f32 %v1257, 1.442695
  %v1327 = vpow.pop %v1326
  %v1328 = vmul.f32 %v1258, 1.442695
  %v1329 = vpow.pop %v1328
  %v1330 = vmul.f32 %v1259, 1.442695
  %v1331 = vpow.pop %v1330
  %v1332 = vmul.f32 %v1260, 1.442695
  %v1333 = vpow.pop %v1332
  %v1334 = vmul.f32 %v1261, 1.442695
  %v1335 = vpow.pop %v1334
  %v1336 = vmul.f32 %v1262, 1.442695
  %v1337 = vpow.pop %v1336
  %v1338 = vmul.f32 %v1263, 1.442695
  %v1339 = vpow.pop %v1338
  %v1340 = vmul.f32 %v1264, 1.442695
  %v1341 = vpow.pop %v1340
  %v1342 = vmul.f32 %v1265, 1.442695
  %v1343 = vpow.pop %v1342
  %v1344 = vmul.f32 %v1266, 1.442695
  %v1345 = vpow.pop %v1344
  %v1346 = vmul.f32 %v1267, 1.442695
  %v1347 = vpow.pop %v1346
  %v1348 = vmul.f32 %v1268, 1.442695
  %v1349 = vpow.pop %v1348
  %v1350 = vmul.f32 %v1269, 1.442695
  %v1351 = vpow.pop %v1350
  %v1352 = vmul.f32 %v1270, 1.442695
  %v1353 = vpow.pop %v1352
  %v1354 = vmul.f32 %v1271, 1.442695
  %v1355 = vpow.pop %v1354
  %v1356 = vmul.f32 %v1272, 1.442695
  %v1357 = vpow.pop %v1356
  %v1358 = vmul.f32 %v1273, 1.442695
  %v1359 = vpow.pop %v1358
  %v1360 = vmul.f32 %v1274, 1.442695
  %v1361 = vpow.pop %v1360
  %v1362 = vmul.f32 %v1275, 1.442695
  %v1363 = vpow.pop %v1362
  %v1364 = vmul.f32 %v1276, 1.442695
  %v1365 = vpow.pop %v1364
  %v1366 = vmul.f32 %v1277, 1.442695
  %v1367 = vpow.pop %v1366
  %v1368 = vmul.f32 %v1278, 1.442695
  %v1369 = vpow.pop %v1368
  %v1370 = vmul.f32 %v1279, 1.442695
  %v1371 = vpow.pop %v1370
  %v1372 = vmul.f32 %v1280, 1.442695
  %v1373 = vpow.pop %v1372
  %v1374 = vmul.f32 %v1281, 1.442695
  %v1375 = vpow.pop %v1374
  %v1376 = vmul.f32 %v1282, 1.442695
  %v1377 = vpow.pop %v1376
  %v1378 = vmul.f32 %v1283, 1.442695
  %v1379 = vpow.pop %v1378
  %v1380 = vmul.f32 %v1284, 1.442695
  %v1381 = vpow.pop %v1380
  %v1382 = vmul.f32 %v1285, 1.442695
  %v1383 = vpow.pop %v1382
  %v1384 = vmul.f32 %v1286, 1.442695
  %v1385 = vpow.pop %v1384
  %v1386 = vmul.f32 %v1287, 1.442695
  %v1387 = vpow.pop %v1386
  %v1388 = vmul.f32 %v1288, 1.442695
  %v1389 = vpow.pop %v1388
  %v1390 = vmul.f32 %v1289, 1.442695
  %v1391 = vpow.pop %v1390
  %v1392 = vmul.f32 %v1290, 1.442695
  %v1393 = vpow.pop %v1392
  %v1394 = vmul.f32 %v1291, 1.442695
  %v1395 = vpow.pop %v1394
  %v1396 = vmul.f32 %v1292, 1.442695
  %v1397 = vpow.pop %v1396
  %v1398 = vmul.f32 %v1293, 1.442695
  %v1399 = vpow.pop %v1398
  %v1400 = vmul.f32 %v1294, 1.442695
  %v1401 = vpow.pop %v1400
  %v1402 = vmul.f32 %v1295, 1.442695
  %v1403 = vpow.pop %v1402
  %v1404 = vmul.f32 %v1296, 1.442695
  %v1405 = vpow.pop %v1404
  %v1406 = vmul.f32 %v1297, 1.442695
  %v1407 = vpow.pop %v1406
  %v1408 = vmul.f32 %v1298, 1.442695
  %v1409 = vpow.pop %v1408
  %v1410 = vmul.f32 %v1299, 1.442695
  %v1411 = vpow.pop %v1410
  %v1412 = vmul.f32 %v1300, 1.442695
  %v1413 = vpow.pop %v1412
  %v1414 = vmul.f32 %v1301, 1.442695
  %v1415 = vpow.pop %v1414
  %v1416 = vmul.f32 %v1302, 1.442695
  %v1417 = vpow.pop %v1416
  %v1418 = vmul.f32 %v1303, 1.442695
  %v1419 = vpow.pop %v1418
  %v1420 = vmul.f32 %v1304, 1.442695
  %v1421 = vpow.pop %v1420
  %v1422 = vmul.f32 %v1305, 1.442695
  %v1423 = vpow.pop %v1422
  %v1424 = vmul.f32 %v1306, 1.442695
  %v1425 = vpow.pop %v1424
  %v1426 = vmul.f32 %v1307, 1.442695
  %v1427 = vpow.pop %v1426
  %v1428 = vmul.f32 %v1308, 1.442695
  %v1429 = vpow.pop %v1428
  %v1430 = vmul.f32 %v1309, 1.442695
  %v1431 = vpow.pop %v1430
  %v1432 = vmul.f32 %v1310, 1.442695
  %v1433 = vpow.pop %v1432
  %v1434 = vmul.f32 %v1311, 1.442695
  %v1435 = vpow.pop %v1434
  %v1436 = vmul.f32 %v1312, 1.442695
  %v1437 = vpow.pop %v1436
  %v1438 = vmul.f32 %v1313, 1.442695
  %v1439 = vpow.pop %v1438
  %v1440 = vmul.f32 %v1314, 1.442695
  %v1441 = vpow.pop %v1440
  %v1442 = vmul.f32 %v1315, 1.442695
  %v1443 = vpow.pop %v1442
  %v1444 = vadd.f32 %v1317, %v1321
  %v1445 = vadd.f32 %v1444, %v1325
  %v1446 = vadd.f32 %v1445, %v1329
  %v1447 = vadd.f32 %v1446, %v1333
  %v1448 = vadd.f32 %v1447, %v1337
  %v1449 = vadd.f32 %v1448, %v1341
  %v1450 = vadd.f32 %v1449, %v1345
  %v1451 = vadd.f32 %v1450, %v1349
  %v1452 = vadd.f32 %v1451, %v1353
  %v1453 = vadd.f32 %v1452, %v1357
  %v1454 = vadd.f32 %v1453, %v1361
  %v1455 = vadd.f32 %v1454, %v1365
  %v1456 = vadd.f32 %v1455, %v1369
  %v1457 = vadd.f32 %v1456, %v1373
  %v1458 = vadd.f32 %v1457, %v1377
  %v1459 = vadd.f32 %v1458, %v1381
  %v1460 = vadd.f32 %v1459, %v1385
  %v1461 = vadd.f32 %v1460, %v1389
  %v1462 = vadd.f32 %v1461, %v1393
  %v1463 = vadd.f32 %v1462, %v1397
  %v1464 = vadd.f32 %v1463, %v1401
  %v1465 = vadd.f32 %v1464, %v1405
  %v1466 = vadd.f32 %v1465, %v1409
  %v1467 = vadd.f32 %v1466, %v1413
  %v1468 = vadd.f32 %v1467, %v1417
  %v1469 = vadd.f32 %v1468, %v1421
  %v1470 = vadd.f32 %v1469, %v1425
  %v1471 = vadd.f32 %v1470, %v1429
  %v1472 = vadd.f32 %v1471, %v1433
  %v1473 = vadd.f32 %v1472, %v1437
  %v1474 = vadd.f32 %v1473, %v1441
  %v1475 = vrot.slane %v1474, 4
  %v1476 = vadd.f32 %v1474, %v1475
  %v1477 = vrot.slane %v1476, 2
  %v1478 = vadd.f32 %v1476, %v1477
  %v1479 = vrot.slane %v1478, 1
  %v1480 = vadd.f32 %v1478, %v1479
  %v1481 = vadd.f32 %v1319, %v1323
  %v1482 = vadd.f32 %v1481, %v1327
  %v1483 = vadd.f32 %v1482, %v1331
  %v1484 = vadd.f32 %v1483, %v1335
  %v1485 = vadd.f32 %v1484, %v1339
  %v1486 = vadd.f32 %v1485, %v1343
  %v1487 = vadd.f32 %v1486, %v1347
  %v1488 = vadd.f32 %v1487, %v1351
  %v1489 = vadd.f32 %v1488, %v1355
  %v1490 = vadd.f32 %v1489, %v1359
  %v1491 = vadd.f32 %v1490, %v1363
  %v1492 = vadd.f32 %v1491, %v1367
  %v1493 = vadd.f32 %v1492, %v1371
  %v1494 = vadd.f32 %v1493, %v1375
  %v1495 = vadd.f32 %v1494, %v1379
  %v1496 = vadd.f32 %v1495, %v1383
  %v1497 = vadd.f32 %v1496, %v1387
  %v1498 = vadd.f32 %v1497, %v1391
  %v1499 = vadd.f32 %v1498, %v1395
  %v1500 = vadd.f32 %v1499, %v1399
  %v1501 = vadd.f32 %v1500, %v1403
  %v1502 = vadd.f32 %v1501, %v1407
  %v1503 = vadd.f32 %v1502, %v1411
  %v1504 = vadd.f32 %v1503, %v1415
  %v1505 = vadd.f32 %v1504, %v1419
  %v1506 = vadd.f32 %v1505, %v1423
  %v1507 = vadd.f32 %v1506, %v1427
  %v1508 = vadd.f32 %v1507, %v1431
  %v1509 = vadd.f32 %v1508, %v1435
  %v1510 = vadd.f32 %v1509, %v1439
  %v1511 = vadd.f32 %v1510, %v1443
  %v1512 = vrot.slane %v1511, 4
  %v1513 = vadd.f32 %v1511, %v1512
  %v1514 = vrot.slane %v1513, 2
  %v1515 = vadd.f32 %v1513, %v1514
  %v1516 = vrot.slane %v1515, 1
  %v1517 = vadd.f32 %v1515, %v1516
  %v1518 = vpack.c.bf16 %v881, %v877
  %v1519 = vpack.c.bf16 %v883, %v879
  %v1520 = vpack.c.bf16 %v1321, %v1317
  %v1521 = vpack.c.bf16 %v1323, %v1319
  %v1522 = vpack.c.bf16 %v1329, %v1325
  %v1523 = vpack.c.bf16 %v1331, %v1327
  %v1524 = vpack.c.bf16 %v1337, %v1333
  %v1525 = vpack.c.bf16 %v1339, %v1335
  %v1526 = vpack.c.bf16 %v1345, %v1341
  %v1527 = vpack.c.bf16 %v1347, %v1343
  %v1528 = vpack.c.bf16 %v1353, %v1349
  %v1529 = vpack.c.bf16 %v1355, %v1351
  %v1530 = vpack.c.bf16 %v1361, %v1357
  %v1531 = vpack.c.bf16 %v1363, %v1359
  %v1532 = vpack.c.bf16 %v1369, %v1365
  %v1533 = vpack.c.bf16 %v1371, %v1367
  %v1534 = vpack.c.bf16 %v1377, %v1373
  %v1535 = vpack.c.bf16 %v1379, %v1375
  %v1536 = vpack.c.bf16 %v1385, %v1381
  %v1537 = vpack.c.bf16 %v1387, %v1383
  %v1538 = vpack.c.bf16 %v1393, %v1389
  %v1539 = vpack.c.bf16 %v1395, %v1391
  %v1540 = vpack.c.bf16 %v1401, %v1397
  %v1541 = vpack.c.bf16 %v1403, %v1399
  %v1542 = vpack.c.bf16 %v1409, %v1405
  %v1543 = vpack.c.bf16 %v1411, %v1407
  %v1544 = vpack.c.bf16 %v1417, %v1413
  %v1545 = vpack.c.bf16 %v1419, %v1415
  %v1546 = vpack.c.bf16 %v1425, %v1421
  %v1547 = vpack.c.bf16 %v1427, %v1423
  %v1548 = vpack.c.bf16 %v1433, %v1429
  %v1549 = vpack.c.bf16 %v1435, %v1431
  %v1550 = vpack.c.bf16 %v1441, %v1437
  %v1551 = vpack.c.bf16 %v1443, %v1439
  %1552 = vmatprep.subr.bf16.mxu0 %v1521
  %1553 = vmatpush1.bf16.msra.mxu0 %v1520
  %1554 = vmatprep.subr.bf16.mxu0 %v1523
  %1555 = vmatpush1.bf16.msra.mxu0 %v1522
  %1556 = vmatprep.subr.bf16.mxu0 %v1525
  %1557 = vmatpush1.bf16.msra.mxu0 %v1524
  %1558 = vmatprep.subr.bf16.mxu0 %v1527
  %1559 = vmatpush1.bf16.msra.mxu0 %v1526
  %1560 = vmatprep.subr.bf16.mxu0 %v1529
  %1561 = vmatpush1.bf16.msra.mxu0 %v1528
  %1562 = vmatprep.subr.bf16.mxu0 %v1531
  %1563 = vmatpush1.bf16.msra.mxu0 %v1530
  %1564 = vmatprep.subr.bf16.mxu0 %v1533
  %1565 = vmatpush1.bf16.msra.mxu0 %v1532
  %1566 = vmatprep.subr.bf16.mxu0 %v1535
  %1567 = vmatpush1.bf16.msra.mxu0 %v1534
  %1568 = vmatprep.subr.bf16.mxu0 %v1537
  %1569 = vmatpush1.bf16.msra.mxu0 %v1536
  %1570 = vmatprep.subr.bf16.mxu0 %v1539
  %1571 = vmatpush1.bf16.msra.mxu0 %v1538
  %1572 = vmatprep.subr.bf16.mxu0 %v1541
  %1573 = vmatpush1.bf16.msra.mxu0 %v1540
  %1574 = vmatprep.subr.bf16.mxu0 %v1543
  %1575 = vmatpush1.bf16.msra.mxu0 %v1542
  %1576 = vmatprep.subr.bf16.mxu0 %v1545
  %1577 = vmatpush1.bf16.msra.mxu0 %v1544
  %1578 = vmatprep.subr.bf16.mxu0 %v1547
  %1579 = vmatpush1.bf16.msra.mxu0 %v1546
  %1580 = vmatprep.subr.bf16.mxu0 %v1549
  %1581 = vmatpush1.bf16.msra.mxu0 %v1548
  %1582 = vmatprep.subr.bf16.mxu0 %v1551
  %1583 = vmatpush1.bf16.msra.mxu0 %v1550
  %1584 = vmatprep.mubr.bf16.mxu0 %v1519
  %1585 = vmatmul.mubr.bf16.gmra.mrb[0].mxu0 %v1518
  %v1586 = vpop.f32.mrb[0].mxu0
  %v1587 = vadd.f32 0.0, %v1586
  %v1588 = vpop.f32.mrb[0].mxu0
  %v1589 = vadd.f32 0.0, %v1588
  %v1590 = vpop.f32.mrb[0].mxu0
  %v1591 = vadd.f32 0.0, %v1590
  %v1592 = vpop.f32.mrb[0].mxu0
  %v1593 = vadd.f32 0.0, %v1592
  %1594 = vdwg.mxu0
  %v1595 = vrcp.pop %v1480
  %v1596 = vrcp.pop %v1517
  %v1597 = vmul.f32 %v1587, %v1595
  %v1598 = vmul.f32 %v1589, %v1596
  %v1599 = vmul.f32 %v1591, %v1595
  %v1600 = vmul.f32 %v1593, %v1596
  %v1601 = vadd.f32 %v1597, %v836
  %v1602 = vadd.f32 %v1598, %v837
  %v1603 = vadd.f32 %v1599, %v838
  %v1604 = vadd.f32 %v1600, %v839
  %s1605 = scalar_lea.vmem %s3, 32
  %1606 = vst [vmem:[%s1605] sm:$0xff] %v1601
  %1607 = vst [vmem:[%s1605 + $0x8] sm:$0xff] %v1602
  %1608 = vst [vmem:[%s1605 + $0x10] sm:$0xff] %v1603
  %1609 = vst [vmem:[%s1605 + $0x18] sm:$0xff] %v1604
  // Predicated region
  $region14: #{self_attention.1} parent=0 // pred_check
    _
  $region15: #{self_attention.1} parent=0 // pred_check_branch
    %1611 = sbr.rel (0) target = $region17
  $region16: #{self_attention.1} parent=0 // pred_region
    _
  $region17: #{self_attention.1} parent=0 // pred_fallthru
    _
  // Predicated region
  $region18: #{self_attention.1} parent=0 // pred_check
    _
  $region19: #{self_attention.1} parent=0 // pred_check_branch
    %1613 = sbr.rel (0) target = $region21
  $region20: #{self_attention.1} parent=0 // pred_region
    _
  $region21: #{self_attention.1} parent=0 // pred_fallthru
    _

</llo_original>
